<compile_context>
chip_gen: v5e
topology: v5e:2x2
jax: 0.10.0
libtpu: 0.0.40
codegen_flags: <defaults>
</compile_context>

<pallas_src>
import functools

import jax
import jax.numpy as jnp
from jax.experimental import pallas as pl
from jax.experimental.pallas import tpu as pltpu

NEG_SLOPE = 0.2     # nn.LeakyReLU(negative_slope=0.2)
BN_EPS = 1e-5       # nn.BatchNorm1d default eps
LANES = 128         # TPU lane width
SUBLANES = 8        # f32 sublane count
EMBED = 2           # Fusion(embed_channels=2)
ZPAD = LANES        # lane-padded width of the fused latent z


def _round_up(x, m):
    return ((x + m - 1) // m) * m


# ---------------------------------------------------------------------------
# Parameter-slab layout: one (total_rows, slab_width) f32 slab per MLP,
# blocks [W1, P1, W2, P2, W3, P3, W4, B4] stacked row-wise.
# ---------------------------------------------------------------------------
def _mlp_layout(dims, use_bn):
    """dims = [d0, d1, d2, d3, d4].  Returns (entries, total_rows, slab_width)
    where entries[j] = (row_offset, n_rows, n_cols) as read by the kernel."""
    p_rows = 3 if use_bn else 1
    pads = [_round_up(d, LANES) for d in dims]
    entries = []
    off = 0

    def add(rows, cols):
        nonlocal off
        entries.append((off, rows, cols))
        off += _round_up(rows, SUBLANES)

    add(dims[0], pads[1]); add(p_rows, pads[1])      # layer 1 (K = real d0)
    add(pads[1], pads[2]); add(p_rows, pads[2])      # layer 2
    add(pads[2], pads[3]); add(p_rows, pads[3])      # layer 3
    add(pads[3], pads[4]); add(1, pads[4])           # layer 4 (no BN)
    return entries, off, max(pads[1:])


def _init_mlp_slab(key, dims, use_bn):
    """PyTorch-like U(-1/sqrt(fan_in), 1/sqrt(fan_in)) init, packed + padded.
    Zero padding never changes the math (pad gamma/beta/bias/weights are 0,
    so padded activation columns stay exactly 0 through BN and LeakyReLU)."""
    entries, total_rows, sw = _mlp_layout(dims, use_bn)
    slab = jnp.zeros((total_rows, sw), jnp.float32)
    keys = jax.random.split(key, 4)
    for i in range(4):
        in_f, out_f = dims[i], dims[i + 1]
        kw, kb = jax.random.split(keys[i])
        bound = 1.0 / (in_f ** 0.5)
        w = jax.random.uniform(kw, (in_f, out_f), jnp.float32, -bound, bound)
        b = jax.random.uniform(kb, (1, out_f), jnp.float32, -bound, bound)
        w_off = entries[2 * i][0]
        p_off = entries[2 * i + 1][0]
        slab = slab.at[w_off:w_off + in_f, :out_f].set(w)
        if i < 3 and use_bn:
            p = jnp.concatenate([b, jnp.ones((1, out_f), jnp.float32),
                                 jnp.zeros((1, out_f), jnp.float32)], axis=0)
        else:
            p = b
        slab = slab.at[p_off:p_off + p.shape[0], :out_f].set(p)
    return slab


def _init_fusion_slab(key, in_ch, embed):
    rows = _round_up(in_ch + 1, SUBLANES)        # Wf rows, then bias row
    sw = _round_up(embed, LANES)
    kw, kb = jax.random.split(key)
    bound = 1.0 / (in_ch ** 0.5)
    w = jax.random.uniform(kw, (in_ch, embed), jnp.float32, -bound, bound)
    b = jax.random.uniform(kb, (embed,), jnp.float32, -bound, bound)
    slab = jnp.zeros((rows, sw), jnp.float32)
    slab = slab.at[:in_ch, :embed].set(w)
    slab = slab.at[in_ch, :embed].set(b)
    return slab


def init_old_autoencoder(key, cfg_rna, cfg_atac):
    k1, k2, k3, k4, k5 = jax.random.split(key, 5)
    enc_dims = [cfg_atac["in_features"]] + list(cfg_atac["layers"])
    dec_a_dims = [cfg_atac["layers"][3], cfg_atac["layers"][2],
                  cfg_atac["layers"][1], cfg_atac["layers"][0],
                  cfg_atac["in_features"]]
    dec_r_dims = [cfg_rna["layers"][3], cfg_rna["layers"][2],
                  cfg_rna["layers"][1], cfg_rna["layers"][0],
                  cfg_rna["in_features"]]
    fusion_in = cfg_rna["layers"][-1] + cfg_atac["layers"][-1]
    return {
        # NOTE: the reference module builds BOTH encoders with cfg_atac.
        "atac_encoder": _init_mlp_slab(k1, enc_dims, cfg_atac["use_batchnorm"]),
        "rna_encoder": _init_mlp_slab(k2, enc_dims, cfg_atac["use_batchnorm"]),
        "fusion": _init_fusion_slab(k3, fusion_in, EMBED),
        "atac_decoder": _init_mlp_slab(k4, dec_a_dims, cfg_atac["use_batchnorm"]),
        "rna_decoder": _init_mlp_slab(k5, dec_r_dims, cfg_rna["use_batchnorm"]),
    }


# ---------------------------------------------------------------------------
# Kernel body (traced once inside the single pallas_call)
# ---------------------------------------------------------------------------
def _view(ref, entry):
    off, rows, cols = entry            # static python ints -> free ref slice
    return ref[off:off + rows, 0:cols]


def _bn_lrelu(y, p, use_bn):
    y = y + p[0:1, :]                                  # Linear bias
    if use_bn:
        # Training-mode BatchNorm1d: batch mean, biased variance computed
        # centered (two-pass) for parity with PyTorch, eps=1e-5, affine.
        mean = jnp.mean(y, axis=0, keepdims=True)
        cen = y - mean
        var = jnp.mean(cen * cen, axis=0, keepdims=True)
        y = cen * jax.lax.rsqrt(var + BN_EPS) * p[1:2, :] + p[2:3, :]
    return jnp.where(y >= 0, y, NEG_SLOPE * y)         # LeakyReLU(0.2)


def _encoder(x, slab_ref, layout, use_bn, use_tanh):
    for i in range(3):
        w = _view(slab_ref, layout[2 * i])
        y = jnp.dot(x, w, preferred_element_type=jnp.float32)
        x = _bn_lrelu(y, _view(slab_ref, layout[2 * i + 1]), use_bn)
    w4 = _view(slab_ref, layout[6])
    out = (jnp.dot(x, w4, preferred_element_type=jnp.float32)
           + _view(slab_ref, layout[7]))
    if use_tanh:
        out = jnp.tanh(out)
    return out


def _decoder(z, slab_ref, layout, use_bn, embed):
    # First layer: K == embed (2) -> 2-term VPU outer-product accumulate
    # instead of a zero-padded-K MXU dot.
    w1 = _view(slab_ref, layout[0])                    # (embed, pad(l2))
    y = z[:, 0:1] * w1[0:1, :]
    for k in range(1, embed):
        y = y + z[:, k:k + 1] * w1[k:k + 1, :]
    x = _bn_lrelu(y, _view(slab_ref, layout[1]), use_bn)
    for i in (1, 2):
        w = _view(slab_ref, layout[2 * i])
        y = jnp.dot(x, w, preferred_element_type=jnp.float32)
        x = _bn_lrelu(y, _view(slab_ref, layout[2 * i + 1]), use_bn)
    w4 = _view(slab_ref, layout[6])
    return (jnp.dot(x, w4, preferred_element_type=jnp.float32)
            + _view(slab_ref, layout[7]))


def _autoencoder_kernel(atac_ref, rna_ref, enc_a_ref, enc_r_ref, fus_ref,
                        dec_a_ref, dec_r_ref,
                        recon_a_ref, recon_r_ref, z_ref,
                        *, enc_layout, dec_a_layout, dec_r_layout,
                        lat_width, fus_bias_row,
                        use_bn_enc, use_bn_dec_a, use_bn_dec_r, use_tanh,
                        dec_in):
    x_a = atac_ref[...].astype(jnp.float32)
    x_r = rna_ref[...].astype(jnp.float32)

    # Both encoders are (faithfully) built from cfg_atac in the reference.
    lat_a = _encoder(x_a, enc_a_ref, enc_layout, use_bn_enc, use_tanh)
    lat_r = _encoder(x_r, enc_r_ref, enc_layout, use_bn_enc, use_tanh)

    # Fusion: z = concat(lat_a, lat_r) @ Wf + bf, as a tiny-K (K=4) VPU
    # outer-product accumulate.  Wf/bf columns are zero-padded to 128 lanes so
    # z is lane-dense with exactly-zero padding columns.
    fus = fus_ref[...]
    z = fus[fus_bias_row:fus_bias_row + 1, :]
    col = 0
    for lat in (lat_a, lat_r):
        for k in range(lat_width):
            z = z + lat[:, k:k + 1] * fus[col:col + 1, :]
            col += 1
    z_ref[...] = z.astype(z_ref.dtype)

    recon_a_ref[...] = _decoder(z, dec_a_ref, dec_a_layout, use_bn_dec_a,
                                dec_in).astype(recon_a_ref.dtype)
    recon_r_ref[...] = _decoder(z, dec_r_ref, dec_r_layout, use_bn_dec_r,
                                dec_in).astype(recon_r_ref.dtype)


# ---------------------------------------------------------------------------
# oldAutoEncoder forward: one fused pallas_call over N minibatches
# ---------------------------------------------------------------------------
def old_autoencoder_forward(params, atac, rna, cfg_rna, cfg_atac,
                            minibatch_size=None):
    """Fused oldAutoEncoder forward.

    minibatch_size=None: the whole batch is one BatchNorm group (exactly the
    reference module's forward on that batch).  Otherwise the batch is split
    into B // minibatch_size independent forwards (one per grid step), each
    normalizing over its own minibatch — the training-loop usage — which
    amortizes launch/prologue overhead over many minibatches per pallas_call.
    """
    B = atac.shape[0]
    assert rna.shape[0] == B
    # The reference builds rna_encoder with cfg_atac, so the rna input must be
    # cfg_atac['in_features'] wide.
    assert atac.shape[1] == cfg_atac["in_features"]
    assert rna.shape[1] == cfg_atac["in_features"]
    assert cfg_atac["layers"][3] == EMBED and cfg_rna["layers"][3] == EMBED
    assert cfg_rna["layers"][-1] == cfg_atac["layers"][-1]

    mb = B if minibatch_size is None else minibatch_size
    assert B % mb == 0 and mb % SUBLANES == 0
    n_steps = B // mb

    f_atac = cfg_atac["in_features"]
    f_rna = cfg_rna["in_features"]
    fpad_atac = _round_up(f_atac, LANES)
    fpad_rna = _round_up(f_rna, LANES)

    enc_dims = [cfg_atac["in_features"]] + list(cfg_atac["layers"])
    dec_a_dims = [cfg_atac["layers"][3], cfg_atac["layers"][2],
                  cfg_atac["layers"][1], cfg_atac["layers"][0], f_atac]
    dec_r_dims = [cfg_rna["layers"][3], cfg_rna["layers"][2],
                  cfg_rna["layers"][1], cfg_rna["layers"][0], f_rna]
    enc_layout, _, _ = _mlp_layout(enc_dims, cfg_atac["use_batchnorm"])
    dec_a_layout, _, _ = _mlp_layout(dec_a_dims, cfg_atac["use_batchnorm"])
    dec_r_layout, _, _ = _mlp_layout(dec_r_dims, cfg_rna["use_batchnorm"])

    lat_width = cfg_atac["layers"][-1]
    fusion_in = cfg_rna["layers"][-1] + cfg_atac["layers"][-1]

    kernel = functools.partial(
        _autoencoder_kernel,
        enc_layout=tuple(enc_layout),
        dec_a_layout=tuple(dec_a_layout),
        dec_r_layout=tuple(dec_r_layout),
        lat_width=lat_width,
        fus_bias_row=fusion_in,
        use_bn_enc=cfg_atac["use_batchnorm"],
        use_bn_dec_a=cfg_atac["use_batchnorm"],
        use_bn_dec_r=cfg_rna["use_batchnorm"],
        use_tanh=cfg_atac["use_tanh"],
        dec_in=EMBED,
    )

    def batch_spec(width):
        return pl.BlockSpec((mb, width), lambda i: (i, 0))

    def resident_spec(arr):
        # Constant index_map: slab is DMA'd once and stays VMEM-resident
        # across all grid steps.
        return pl.BlockSpec(arr.shape, lambda i: (0, 0))

    in_specs = [batch_spec(atac.shape[1]), batch_spec(rna.shape[1]),
                resident_spec(params["atac_encoder"]),
                resident_spec(params["rna_encoder"]),
                resident_spec(params["fusion"]),
                resident_spec(params["atac_decoder"]),
                resident_spec(params["rna_decoder"])]

    out_shapes = (jax.ShapeDtypeStruct((B, fpad_atac), jnp.float32),
                  jax.ShapeDtypeStruct((B, fpad_rna), jnp.float32),
                  jax.ShapeDtypeStruct((B, ZPAD), jnp.float32))
    out_specs = (batch_spec(fpad_atac), batch_spec(fpad_rna), batch_spec(ZPAD))

    recon_a_p, recon_r_p, z_p = pl.pallas_call(
        kernel,
        out_shape=out_shapes,
        grid=(n_steps,),
        in_specs=in_specs,
        out_specs=out_specs,
        compiler_params=pltpu.CompilerParams(
            # Grid steps are independent minibatches: 'parallel' lets v7x
            # shard them across both TensorCores; harmless on v5e/v6e.
            dimension_semantics=("parallel",)),
    )(atac, rna, params["atac_encoder"], params["rna_encoder"],
      params["fusion"], params["atac_decoder"], params["rna_decoder"])

    # Slice lane-padded outputs back to true widths (pad columns are exact 0).
    return recon_a_p[:, :f_atac], recon_r_p[:, :f_rna], z_p[:, :EMBED]


# ---------------------------------------------------------------------------
if __name__ == "__main__":
    # Small shapes consistent with the module (scaled-down CONFIG).
    cfg_atac = {"in_features": 128, "layers": [64, 32, 16, 2],
                "minibatch_size": 8, "use_batchnorm": True, "use_tanh": False}
    cfg_rna = {"in_features": 96, "layers": [64, 32, 16, 2],
               "minibatch_size": 8, "use_batchnorm": True, "use_tanh": False}
    MB = 8       # minibatch size (BatchNorm group, as in a training loop)
    N_MB = 4     # minibatches fused into one pallas_call (grid=(4,))
    B = MB * N_MB

    key = jax.random.PRNGKey(0)
    k_param, k_atac, k_rna = jax.random.split(key, 3)
    params = init_old_autoencoder(k_param, cfg_rna, cfg_atac)

    atac = jax.random.normal(k_atac, (B, cfg_atac["in_features"]), jnp.float32)
    # rna_encoder is (faithfully) built with cfg_atac, so the rna input must
    # have cfg_atac['in_features'] features.
    rna = jax.random.normal(k_rna, (B, cfg_atac["in_features"]), jnp.float32)

    recon_atac, recon_rna, z = old_autoencoder_forward(
        params, atac, rna, cfg_rna, cfg_atac, minibatch_size=MB)
    jax.block_until_ready((recon_atac, recon_rna, z))

    assert recon_atac.shape == (B, cfg_atac["in_features"])
    assert recon_rna.shape == (B, cfg_rna["in_features"])
    assert z.shape == (B, EMBED)
    assert bool(jnp.all(jnp.isfinite(recon_atac)))
    assert bool(jnp.all(jnp.isfinite(recon_rna)))
    assert bool(jnp.all(jnp.isfinite(z)))
    # TODO(synk): BatchNorm running-stats (momentum) tracking is not modeled;
    # only the forward's training-mode batch statistics are computed.
    print("KERNEL_OK")
</pallas_src>

<mosaic_0001>
module attributes {stable_mosaic.version = 11 : i64} {
  func.func @_autoencoder_kernel(%arg0: i32, %arg1: memref<8x128xf32, #tpu.memory_space<vmem>>, %arg2: memref<8x128xf32, #tpu.memory_space<vmem>>, %arg3: memref<544x128xf32, #tpu.memory_space<vmem>>, %arg4: memref<544x128xf32, #tpu.memory_space<vmem>>, %arg5: memref<8x128xf32, #tpu.memory_space<vmem>>, %arg6: memref<424x128xf32, #tpu.memory_space<vmem>>, %arg7: memref<424x128xf32, #tpu.memory_space<vmem>>, %arg8: memref<8x128xf32, #tpu.memory_space<vmem>>, %arg9: memref<8x128xf32, #tpu.memory_space<vmem>>, %arg10: memref<8x128xf32, #tpu.memory_space<vmem>>) attributes {dimension_semantics = [#tpu.dimension_semantics<parallel>], iteration_bounds = array<i64: 4>, scalar_prefetch = 0 : i64, scratch_operands = 0 : i64, tpu.core_type = #tpu.core_type<tc>, window_params = [{transform_indices = @transform_0, window_bounds = array<i64: 8, 128>}, {transform_indices = @transform_1, window_bounds = array<i64: 8, 128>}, {pipeline_mode = #tpu.pipeline_mode<synchronous>, transform_indices = @transform_2, window_bounds = array<i64: 544, 128>}, {pipeline_mode = #tpu.pipeline_mode<synchronous>, transform_indices = @transform_3, window_bounds = array<i64: 544, 128>}, {pipeline_mode = #tpu.pipeline_mode<synchronous>, transform_indices = @transform_4, window_bounds = array<i64: 8, 128>}, {pipeline_mode = #tpu.pipeline_mode<synchronous>, transform_indices = @transform_5, window_bounds = array<i64: 424, 128>}, {pipeline_mode = #tpu.pipeline_mode<synchronous>, transform_indices = @transform_6, window_bounds = array<i64: 424, 128>}, {transform_indices = @transform_7, window_bounds = array<i64: 8, 128>}, {transform_indices = @transform_8, window_bounds = array<i64: 8, 128>}, {transform_indices = @transform_9, window_bounds = array<i64: 8, 128>}]} {
    %c0 = arith.constant 0 : index
    %c0_0 = arith.constant 0 : index
    %0 = vector.load %arg1[%c0, %c0_0] : memref<8x128xf32, #tpu.memory_space<vmem>>, vector<8x128xf32>
    %c0_1 = arith.constant 0 : index
    %c0_2 = arith.constant 0 : index
    %1 = vector.load %arg2[%c0_1, %c0_2] : memref<8x128xf32, #tpu.memory_space<vmem>>, vector<8x128xf32>
    %c0_3 = arith.constant 0 : index
    %c0_4 = arith.constant 0 : index
    %2 = vector.load %arg3[%c0_3, %c0_4] : memref<544x128xf32, #tpu.memory_space<vmem>>, vector<128x128xf32>
    %cst = arith.constant dense<0.000000e+00> : vector<8x128xf32>
    %3 = tpu.matmul %0, %2, %cst {dimension_numbers = #tpu.dot_dimension_numbers<[1], [0], [0], [1], [0, 0, 1, 1], [], []>} : vector<8x128xf32>, vector<128x128xf32>, vector<8x128xf32> -> vector<8x128xf32>
    %c128 = arith.constant 128 : index
    %c0_5 = arith.constant 0 : index
    %4 = vector.load %arg3[%c128, %c0_5] : memref<544x128xf32, #tpu.memory_space<vmem>>, vector<3x128xf32>
    %5 = vector.extract_strided_slice %4 {offsets = [0, 0], sizes = [1, 128], strides = [1, 1]} : vector<3x128xf32> to vector<1x128xf32>
    %6 = vector.broadcast %5 : vector<1x128xf32> to vector<8x128xf32>
    %7 = arith.addf %3, %6 : vector<8x128xf32>
    %cst_6 = arith.constant dense<0.000000e+00> : vector<128xf32>
    %8 = vector.multi_reduction <add>, %7, %cst_6 [0] : vector<8x128xf32> to vector<128xf32>
    %9 = vector.shape_cast %8 : vector<128xf32> to vector<1x128xf32>
    %cst_7 = arith.constant 8.000000e+00 : f32
    %10 = vector.broadcast %cst_7 : f32 to vector<1x128xf32>
    %11 = arith.divf %9, %10 : vector<1x128xf32>
    %12 = vector.broadcast %11 : vector<1x128xf32> to vector<8x128xf32>
    %13 = arith.subf %7, %12 : vector<8x128xf32>
    %14 = arith.mulf %13, %13 : vector<8x128xf32>
    %cst_8 = arith.constant dense<0.000000e+00> : vector<128xf32>
    %15 = vector.multi_reduction <add>, %14, %cst_8 [0] : vector<8x128xf32> to vector<128xf32>
    %16 = vector.shape_cast %15 : vector<128xf32> to vector<1x128xf32>
    %cst_9 = arith.constant 8.000000e+00 : f32
    %17 = vector.broadcast %cst_9 : f32 to vector<1x128xf32>
    %18 = arith.divf %16, %17 : vector<1x128xf32>
    %cst_10 = arith.constant 9.99999974E-6 : f32
    %19 = vector.broadcast %cst_10 : f32 to vector<1x128xf32>
    %20 = arith.addf %18, %19 : vector<1x128xf32>
    %21 = math.rsqrt %20 : vector<1x128xf32>
    %22 = vector.broadcast %21 : vector<1x128xf32> to vector<8x128xf32>
    %23 = arith.mulf %13, %22 : vector<8x128xf32>
    %24 = vector.extract_strided_slice %4 {offsets = [1, 0], sizes = [1, 128], strides = [1, 1]} : vector<3x128xf32> to vector<1x128xf32>
    %25 = vector.broadcast %24 : vector<1x128xf32> to vector<8x128xf32>
    %26 = arith.mulf %23, %25 : vector<8x128xf32>
    %27 = vector.extract_strided_slice %4 {offsets = [2, 0], sizes = [1, 128], strides = [1, 1]} : vector<3x128xf32> to vector<1x128xf32>
    %28 = vector.broadcast %27 : vector<1x128xf32> to vector<8x128xf32>
    %29 = arith.addf %26, %28 : vector<8x128xf32>
    %cst_11 = arith.constant 0.000000e+00 : f32
    %30 = vector.broadcast %cst_11 : f32 to vector<8x128xf32>
    %31 = arith.cmpf oge, %29, %30 : vector<8x128xf32>
    %cst_12 = arith.constant 2.000000e-01 : f32
    %32 = vector.broadcast %cst_12 : f32 to vector<8x128xf32>
    %33 = arith.mulf %32, %29 : vector<8x128xf32>
    %34 = arith.select %31, %29, %33 : vector<8x128xi1>, vector<8x128xf32>
    %c136 = arith.constant 136 : index
    %c0_13 = arith.constant 0 : index
    %35 = vector.load %arg3[%c136, %c0_13] : memref<544x128xf32, #tpu.memory_space<vmem>>, vector<128x128xf32>
    %cst_14 = arith.constant dense<0.000000e+00> : vector<8x128xf32>
    %36 = tpu.matmul %34, %35, %cst_14 {dimension_numbers = #tpu.dot_dimension_numbers<[1], [0], [0], [1], [0, 0, 1, 1], [], []>} : vector<8x128xf32>, vector<128x128xf32>, vector<8x128xf32> -> vector<8x128xf32>
    %c264 = arith.constant 264 : index
    %c0_15 = arith.constant 0 : index
    %37 = vector.load %arg3[%c264, %c0_15] : memref<544x128xf32, #tpu.memory_space<vmem>>, vector<3x128xf32>
    %38 = vector.extract_strided_slice %37 {offsets = [0, 0], sizes = [1, 128], strides = [1, 1]} : vector<3x128xf32> to vector<1x128xf32>
    %39 = vector.broadcast %38 : vector<1x128xf32> to vector<8x128xf32>
    %40 = arith.addf %36, %39 : vector<8x128xf32>
    %cst_16 = arith.constant dense<0.000000e+00> : vector<128xf32>
    %41 = vector.multi_reduction <add>, %40, %cst_16 [0] : vector<8x128xf32> to vector<128xf32>
    %42 = vector.shape_cast %41 : vector<128xf32> to vector<1x128xf32>
    %cst_17 = arith.constant 8.000000e+00 : f32
    %43 = vector.broadcast %cst_17 : f32 to vector<1x128xf32>
    %44 = arith.divf %42, %43 : vector<1x128xf32>
    %45 = vector.broadcast %44 : vector<1x128xf32> to vector<8x128xf32>
    %46 = arith.subf %40, %45 : vector<8x128xf32>
    %47 = arith.mulf %46, %46 : vector<8x128xf32>
    %cst_18 = arith.constant dense<0.000000e+00> : vector<128xf32>
    %48 = vector.multi_reduction <add>, %47, %cst_18 [0] : vector<8x128xf32> to vector<128xf32>
    %49 = vector.shape_cast %48 : vector<128xf32> to vector<1x128xf32>
    %cst_19 = arith.constant 8.000000e+00 : f32
    %50 = vector.broadcast %cst_19 : f32 to vector<1x128xf32>
    %51 = arith.divf %49, %50 : vector<1x128xf32>
    %cst_20 = arith.constant 9.99999974E-6 : f32
    %52 = vector.broadcast %cst_20 : f32 to vector<1x128xf32>
    %53 = arith.addf %51, %52 : vector<1x128xf32>
    %54 = math.rsqrt %53 : vector<1x128xf32>
    %55 = vector.broadcast %54 : vector<1x128xf32> to vector<8x128xf32>
    %56 = arith.mulf %46, %55 : vector<8x128xf32>
    %57 = vector.extract_strided_slice %37 {offsets = [1, 0], sizes = [1, 128], strides = [1, 1]} : vector<3x128xf32> to vector<1x128xf32>
    %58 = vector.broadcast %57 : vector<1x128xf32> to vector<8x128xf32>
    %59 = arith.mulf %56, %58 : vector<8x128xf32>
    %60 = vector.extract_strided_slice %37 {offsets = [2, 0], sizes = [1, 128], strides = [1, 1]} : vector<3x128xf32> to vector<1x128xf32>
    %61 = vector.broadcast %60 : vector<1x128xf32> to vector<8x128xf32>
    %62 = arith.addf %59, %61 : vector<8x128xf32>
    %cst_21 = arith.constant 0.000000e+00 : f32
    %63 = vector.broadcast %cst_21 : f32 to vector<8x128xf32>
    %64 = arith.cmpf oge, %62, %63 : vector<8x128xf32>
    %cst_22 = arith.constant 2.000000e-01 : f32
    %65 = vector.broadcast %cst_22 : f32 to vector<8x128xf32>
    %66 = arith.mulf %65, %62 : vector<8x128xf32>
    %67 = arith.select %64, %62, %66 : vector<8x128xi1>, vector<8x128xf32>
    %c272 = arith.constant 272 : index
    %c0_23 = arith.constant 0 : index
    %68 = vector.load %arg3[%c272, %c0_23] : memref<544x128xf32, #tpu.memory_space<vmem>>, vector<128x128xf32>
    %cst_24 = arith.constant dense<0.000000e+00> : vector<8x128xf32>
    %69 = tpu.matmul %67, %68, %cst_24 {dimension_numbers = #tpu.dot_dimension_numbers<[1], [0], [0], [1], [0, 0, 1, 1], [], []>} : vector<8x128xf32>, vector<128x128xf32>, vector<8x128xf32> -> vector<8x128xf32>
    %c400 = arith.constant 400 : index
    %c0_25 = arith.constant 0 : index
    %70 = vector.load %arg3[%c400, %c0_25] : memref<544x128xf32, #tpu.memory_space<vmem>>, vector<3x128xf32>
    %71 = vector.extract_strided_slice %70 {offsets = [0, 0], sizes = [1, 128], strides = [1, 1]} : vector<3x128xf32> to vector<1x128xf32>
    %72 = vector.broadcast %71 : vector<1x128xf32> to vector<8x128xf32>
    %73 = arith.addf %69, %72 : vector<8x128xf32>
    %cst_26 = arith.constant dense<0.000000e+00> : vector<128xf32>
    %74 = vector.multi_reduction <add>, %73, %cst_26 [0] : vector<8x128xf32> to vector<128xf32>
    %75 = vector.shape_cast %74 : vector<128xf32> to vector<1x128xf32>
    %cst_27 = arith.constant 8.000000e+00 : f32
    %76 = vector.broadcast %cst_27 : f32 to vector<1x128xf32>
    %77 = arith.divf %75, %76 : vector<1x128xf32>
    %78 = vector.broadcast %77 : vector<1x128xf32> to vector<8x128xf32>
    %79 = arith.subf %73, %78 : vector<8x128xf32>
    %80 = arith.mulf %79, %79 : vector<8x128xf32>
    %cst_28 = arith.constant dense<0.000000e+00> : vector<128xf32>
    %81 = vector.multi_reduction <add>, %80, %cst_28 [0] : vector<8x128xf32> to vector<128xf32>
    %82 = vector.shape_cast %81 : vector<128xf32> to vector<1x128xf32>
    %cst_29 = arith.constant 8.000000e+00 : f32
    %83 = vector.broadcast %cst_29 : f32 to vector<1x128xf32>
    %84 = arith.divf %82, %83 : vector<1x128xf32>
    %cst_30 = arith.constant 9.99999974E-6 : f32
    %85 = vector.broadcast %cst_30 : f32 to vector<1x128xf32>
    %86 = arith.addf %84, %85 : vector<1x128xf32>
    %87 = math.rsqrt %86 : vector<1x128xf32>
    %88 = vector.broadcast %87 : vector<1x128xf32> to vector<8x128xf32>
    %89 = arith.mulf %79, %88 : vector<8x128xf32>
    %90 = vector.extract_strided_slice %70 {offsets = [1, 0], sizes = [1, 128], strides = [1, 1]} : vector<3x128xf32> to vector<1x128xf32>
    %91 = vector.broadcast %90 : vector<1x128xf32> to vector<8x128xf32>
    %92 = arith.mulf %89, %91 : vector<8x128xf32>
    %93 = vector.extract_strided_slice %70 {offsets = [2, 0], sizes = [1, 128], strides = [1, 1]} : vector<3x128xf32> to vector<1x128xf32>
    %94 = vector.broadcast %93 : vector<1x128xf32> to vector<8x128xf32>
    %95 = arith.addf %92, %94 : vector<8x128xf32>
    %cst_31 = arith.constant 0.000000e+00 : f32
    %96 = vector.broadcast %cst_31 : f32 to vector<8x128xf32>
    %97 = arith.cmpf oge, %95, %96 : vector<8x128xf32>
    %cst_32 = arith.constant 2.000000e-01 : f32
    %98 = vector.broadcast %cst_32 : f32 to vector<8x128xf32>
    %99 = arith.mulf %98, %95 : vector<8x128xf32>
    %100 = arith.select %97, %95, %99 : vector<8x128xi1>, vector<8x128xf32>
    %c408 = arith.constant 408 : index
    %c0_33 = arith.constant 0 : index
    %101 = vector.load %arg3[%c408, %c0_33] : memref<544x128xf32, #tpu.memory_space<vmem>>, vector<128x128xf32>
    %cst_34 = arith.constant dense<0.000000e+00> : vector<8x128xf32>
    %102 = tpu.matmul %100, %101, %cst_34 {dimension_numbers = #tpu.dot_dimension_numbers<[1], [0], [0], [1], [0, 0, 1, 1], [], []>} : vector<8x128xf32>, vector<128x128xf32>, vector<8x128xf32> -> vector<8x128xf32>
    %c536 = arith.constant 536 : index
    %c0_35 = arith.constant 0 : index
    %103 = vector.load %arg3[%c536, %c0_35] : memref<544x128xf32, #tpu.memory_space<vmem>>, vector<1x128xf32>
    %104 = vector.broadcast %103 : vector<1x128xf32> to vector<8x128xf32>
    %105 = arith.addf %102, %104 : vector<8x128xf32>
    %c0_36 = arith.constant 0 : index
    %c0_37 = arith.constant 0 : index
    %106 = vector.load %arg4[%c0_36, %c0_37] : memref<544x128xf32, #tpu.memory_space<vmem>>, vector<128x128xf32>
    %cst_38 = arith.constant dense<0.000000e+00> : vector<8x128xf32>
    %107 = tpu.matmul %1, %106, %cst_38 {dimension_numbers = #tpu.dot_dimension_numbers<[1], [0], [0], [1], [0, 0, 1, 1], [], []>} : vector<8x128xf32>, vector<128x128xf32>, vector<8x128xf32> -> vector<8x128xf32>
    %c128_39 = arith.constant 128 : index
    %c0_40 = arith.constant 0 : index
    %108 = vector.load %arg4[%c128_39, %c0_40] : memref<544x128xf32, #tpu.memory_space<vmem>>, vector<3x128xf32>
    %109 = vector.extract_strided_slice %108 {offsets = [0, 0], sizes = [1, 128], strides = [1, 1]} : vector<3x128xf32> to vector<1x128xf32>
    %110 = vector.broadcast %109 : vector<1x128xf32> to vector<8x128xf32>
    %111 = arith.addf %107, %110 : vector<8x128xf32>
    %cst_41 = arith.constant dense<0.000000e+00> : vector<128xf32>
    %112 = vector.multi_reduction <add>, %111, %cst_41 [0] : vector<8x128xf32> to vector<128xf32>
    %113 = vector.shape_cast %112 : vector<128xf32> to vector<1x128xf32>
    %cst_42 = arith.constant 8.000000e+00 : f32
    %114 = vector.broadcast %cst_42 : f32 to vector<1x128xf32>
    %115 = arith.divf %113, %114 : vector<1x128xf32>
    %116 = vector.broadcast %115 : vector<1x128xf32> to vector<8x128xf32>
    %117 = arith.subf %111, %116 : vector<8x128xf32>
    %118 = arith.mulf %117, %117 : vector<8x128xf32>
    %cst_43 = arith.constant dense<0.000000e+00> : vector<128xf32>
    %119 = vector.multi_reduction <add>, %118, %cst_43 [0] : vector<8x128xf32> to vector<128xf32>
    %120 = vector.shape_cast %119 : vector<128xf32> to vector<1x128xf32>
    %cst_44 = arith.constant 8.000000e+00 : f32
    %121 = vector.broadcast %cst_44 : f32 to vector<1x128xf32>
    %122 = arith.divf %120, %121 : vector<1x128xf32>
    %cst_45 = arith.constant 9.99999974E-6 : f32
    %123 = vector.broadcast %cst_45 : f32 to vector<1x128xf32>
    %124 = arith.addf %122, %123 : vector<1x128xf32>
    %125 = math.rsqrt %124 : vector<1x128xf32>
    %126 = vector.broadcast %125 : vector<1x128xf32> to vector<8x128xf32>
    %127 = arith.mulf %117, %126 : vector<8x128xf32>
    %128 = vector.extract_strided_slice %108 {offsets = [1, 0], sizes = [1, 128], strides = [1, 1]} : vector<3x128xf32> to vector<1x128xf32>
    %129 = vector.broadcast %128 : vector<1x128xf32> to vector<8x128xf32>
    %130 = arith.mulf %127, %129 : vector<8x128xf32>
    %131 = vector.extract_strided_slice %108 {offsets = [2, 0], sizes = [1, 128], strides = [1, 1]} : vector<3x128xf32> to vector<1x128xf32>
    %132 = vector.broadcast %131 : vector<1x128xf32> to vector<8x128xf32>
    %133 = arith.addf %130, %132 : vector<8x128xf32>
    %cst_46 = arith.constant 0.000000e+00 : f32
    %134 = vector.broadcast %cst_46 : f32 to vector<8x128xf32>
    %135 = arith.cmpf oge, %133, %134 : vector<8x128xf32>
    %cst_47 = arith.constant 2.000000e-01 : f32
    %136 = vector.broadcast %cst_47 : f32 to vector<8x128xf32>
    %137 = arith.mulf %136, %133 : vector<8x128xf32>
    %138 = arith.select %135, %133, %137 : vector<8x128xi1>, vector<8x128xf32>
    %c136_48 = arith.constant 136 : index
    %c0_49 = arith.constant 0 : index
    %139 = vector.load %arg4[%c136_48, %c0_49] : memref<544x128xf32, #tpu.memory_space<vmem>>, vector<128x128xf32>
    %cst_50 = arith.constant dense<0.000000e+00> : vector<8x128xf32>
    %140 = tpu.matmul %138, %139, %cst_50 {dimension_numbers = #tpu.dot_dimension_numbers<[1], [0], [0], [1], [0, 0, 1, 1], [], []>} : vector<8x128xf32>, vector<128x128xf32>, vector<8x128xf32> -> vector<8x128xf32>
    %c264_51 = arith.constant 264 : index
    %c0_52 = arith.constant 0 : index
    %141 = vector.load %arg4[%c264_51, %c0_52] : memref<544x128xf32, #tpu.memory_space<vmem>>, vector<3x128xf32>
    %142 = vector.extract_strided_slice %141 {offsets = [0, 0], sizes = [1, 128], strides = [1, 1]} : vector<3x128xf32> to vector<1x128xf32>
    %143 = vector.broadcast %142 : vector<1x128xf32> to vector<8x128xf32>
    %144 = arith.addf %140, %143 : vector<8x128xf32>
    %cst_53 = arith.constant dense<0.000000e+00> : vector<128xf32>
    %145 = vector.multi_reduction <add>, %144, %cst_53 [0] : vector<8x128xf32> to vector<128xf32>
    %146 = vector.shape_cast %145 : vector<128xf32> to vector<1x128xf32>
    %cst_54 = arith.constant 8.000000e+00 : f32
    %147 = vector.broadcast %cst_54 : f32 to vector<1x128xf32>
    %148 = arith.divf %146, %147 : vector<1x128xf32>
    %149 = vector.broadcast %148 : vector<1x128xf32> to vector<8x128xf32>
    %150 = arith.subf %144, %149 : vector<8x128xf32>
    %151 = arith.mulf %150, %150 : vector<8x128xf32>
    %cst_55 = arith.constant dense<0.000000e+00> : vector<128xf32>
    %152 = vector.multi_reduction <add>, %151, %cst_55 [0] : vector<8x128xf32> to vector<128xf32>
    %153 = vector.shape_cast %152 : vector<128xf32> to vector<1x128xf32>
    %cst_56 = arith.constant 8.000000e+00 : f32
    %154 = vector.broadcast %cst_56 : f32 to vector<1x128xf32>
    %155 = arith.divf %153, %154 : vector<1x128xf32>
    %cst_57 = arith.constant 9.99999974E-6 : f32
    %156 = vector.broadcast %cst_57 : f32 to vector<1x128xf32>
    %157 = arith.addf %155, %156 : vector<1x128xf32>
    %158 = math.rsqrt %157 : vector<1x128xf32>
    %159 = vector.broadcast %158 : vector<1x128xf32> to vector<8x128xf32>
    %160 = arith.mulf %150, %159 : vector<8x128xf32>
    %161 = vector.extract_strided_slice %141 {offsets = [1, 0], sizes = [1, 128], strides = [1, 1]} : vector<3x128xf32> to vector<1x128xf32>
    %162 = vector.broadcast %161 : vector<1x128xf32> to vector<8x128xf32>
    %163 = arith.mulf %160, %162 : vector<8x128xf32>
    %164 = vector.extract_strided_slice %141 {offsets = [2, 0], sizes = [1, 128], strides = [1, 1]} : vector<3x128xf32> to vector<1x128xf32>
    %165 = vector.broadcast %164 : vector<1x128xf32> to vector<8x128xf32>
    %166 = arith.addf %163, %165 : vector<8x128xf32>
    %cst_58 = arith.constant 0.000000e+00 : f32
    %167 = vector.broadcast %cst_58 : f32 to vector<8x128xf32>
    %168 = arith.cmpf oge, %166, %167 : vector<8x128xf32>
    %cst_59 = arith.constant 2.000000e-01 : f32
    %169 = vector.broadcast %cst_59 : f32 to vector<8x128xf32>
    %170 = arith.mulf %169, %166 : vector<8x128xf32>
    %171 = arith.select %168, %166, %170 : vector<8x128xi1>, vector<8x128xf32>
    %c272_60 = arith.constant 272 : index
    %c0_61 = arith.constant 0 : index
    %172 = vector.load %arg4[%c272_60, %c0_61] : memref<544x128xf32, #tpu.memory_space<vmem>>, vector<128x128xf32>
    %cst_62 = arith.constant dense<0.000000e+00> : vector<8x128xf32>
    %173 = tpu.matmul %171, %172, %cst_62 {dimension_numbers = #tpu.dot_dimension_numbers<[1], [0], [0], [1], [0, 0, 1, 1], [], []>} : vector<8x128xf32>, vector<128x128xf32>, vector<8x128xf32> -> vector<8x128xf32>
    %c400_63 = arith.constant 400 : index
    %c0_64 = arith.constant 0 : index
    %174 = vector.load %arg4[%c400_63, %c0_64] : memref<544x128xf32, #tpu.memory_space<vmem>>, vector<3x128xf32>
    %175 = vector.extract_strided_slice %174 {offsets = [0, 0], sizes = [1, 128], strides = [1, 1]} : vector<3x128xf32> to vector<1x128xf32>
    %176 = vector.broadcast %175 : vector<1x128xf32> to vector<8x128xf32>
    %177 = arith.addf %173, %176 : vector<8x128xf32>
    %cst_65 = arith.constant dense<0.000000e+00> : vector<128xf32>
    %178 = vector.multi_reduction <add>, %177, %cst_65 [0] : vector<8x128xf32> to vector<128xf32>
    %179 = vector.shape_cast %178 : vector<128xf32> to vector<1x128xf32>
    %cst_66 = arith.constant 8.000000e+00 : f32
    %180 = vector.broadcast %cst_66 : f32 to vector<1x128xf32>
    %181 = arith.divf %179, %180 : vector<1x128xf32>
    %182 = vector.broadcast %181 : vector<1x128xf32> to vector<8x128xf32>
    %183 = arith.subf %177, %182 : vector<8x128xf32>
    %184 = arith.mulf %183, %183 : vector<8x128xf32>
    %cst_67 = arith.constant dense<0.000000e+00> : vector<128xf32>
    %185 = vector.multi_reduction <add>, %184, %cst_67 [0] : vector<8x128xf32> to vector<128xf32>
    %186 = vector.shape_cast %185 : vector<128xf32> to vector<1x128xf32>
    %cst_68 = arith.constant 8.000000e+00 : f32
    %187 = vector.broadcast %cst_68 : f32 to vector<1x128xf32>
    %188 = arith.divf %186, %187 : vector<1x128xf32>
    %cst_69 = arith.constant 9.99999974E-6 : f32
    %189 = vector.broadcast %cst_69 : f32 to vector<1x128xf32>
    %190 = arith.addf %188, %189 : vector<1x128xf32>
    %191 = math.rsqrt %190 : vector<1x128xf32>
    %192 = vector.broadcast %191 : vector<1x128xf32> to vector<8x128xf32>
    %193 = arith.mulf %183, %192 : vector<8x128xf32>
    %194 = vector.extract_strided_slice %174 {offsets = [1, 0], sizes = [1, 128], strides = [1, 1]} : vector<3x128xf32> to vector<1x128xf32>
    %195 = vector.broadcast %194 : vector<1x128xf32> to vector<8x128xf32>
    %196 = arith.mulf %193, %195 : vector<8x128xf32>
    %197 = vector.extract_strided_slice %174 {offsets = [2, 0], sizes = [1, 128], strides = [1, 1]} : vector<3x128xf32> to vector<1x128xf32>
    %198 = vector.broadcast %197 : vector<1x128xf32> to vector<8x128xf32>
    %199 = arith.addf %196, %198 : vector<8x128xf32>
    %cst_70 = arith.constant 0.000000e+00 : f32
    %200 = vector.broadcast %cst_70 : f32 to vector<8x128xf32>
    %201 = arith.cmpf oge, %199, %200 : vector<8x128xf32>
    %cst_71 = arith.constant 2.000000e-01 : f32
    %202 = vector.broadcast %cst_71 : f32 to vector<8x128xf32>
    %203 = arith.mulf %202, %199 : vector<8x128xf32>
    %204 = arith.select %201, %199, %203 : vector<8x128xi1>, vector<8x128xf32>
    %c408_72 = arith.constant 408 : index
    %c0_73 = arith.constant 0 : index
    %205 = vector.load %arg4[%c408_72, %c0_73] : memref<544x128xf32, #tpu.memory_space<vmem>>, vector<128x128xf32>
    %cst_74 = arith.constant dense<0.000000e+00> : vector<8x128xf32>
    %206 = tpu.matmul %204, %205, %cst_74 {dimension_numbers = #tpu.dot_dimension_numbers<[1], [0], [0], [1], [0, 0, 1, 1], [], []>} : vector<8x128xf32>, vector<128x128xf32>, vector<8x128xf32> -> vector<8x128xf32>
    %c536_75 = arith.constant 536 : index
    %c0_76 = arith.constant 0 : index
    %207 = vector.load %arg4[%c536_75, %c0_76] : memref<544x128xf32, #tpu.memory_space<vmem>>, vector<1x128xf32>
    %208 = vector.broadcast %207 : vector<1x128xf32> to vector<8x128xf32>
    %209 = arith.addf %206, %208 : vector<8x128xf32>
    %c0_77 = arith.constant 0 : index
    %c0_78 = arith.constant 0 : index
    %210 = vector.load %arg5[%c0_77, %c0_78] : memref<8x128xf32, #tpu.memory_space<vmem>>, vector<8x128xf32>
    %211 = vector.extract_strided_slice %210 {offsets = [4, 0], sizes = [1, 128], strides = [1, 1]} : vector<8x128xf32> to vector<1x128xf32>
    %212 = vector.extract_strided_slice %105 {offsets = [0, 0], sizes = [8, 1], strides = [1, 1]} : vector<8x128xf32> to vector<8x1xf32>
    %213 = vector.extract_strided_slice %210 {offsets = [0, 0], sizes = [1, 128], strides = [1, 1]} : vector<8x128xf32> to vector<1x128xf32>
    %214 = vector.broadcast %212 : vector<8x1xf32> to vector<8x128xf32>
    %215 = vector.broadcast %213 : vector<1x128xf32> to vector<8x128xf32>
    %216 = arith.mulf %214, %215 : vector<8x128xf32>
    %217 = vector.broadcast %211 : vector<1x128xf32> to vector<8x128xf32>
    %218 = arith.addf %217, %216 : vector<8x128xf32>
    %219 = vector.extract_strided_slice %105 {offsets = [0, 1], sizes = [8, 1], strides = [1, 1]} : vector<8x128xf32> to vector<8x1xf32>
    %220 = vector.extract_strided_slice %210 {offsets = [1, 0], sizes = [1, 128], strides = [1, 1]} : vector<8x128xf32> to vector<1x128xf32>
    %221 = vector.broadcast %219 : vector<8x1xf32> to vector<8x128xf32>
    %222 = vector.broadcast %220 : vector<1x128xf32> to vector<8x128xf32>
    %223 = arith.mulf %221, %222 : vector<8x128xf32>
    %224 = arith.addf %218, %223 : vector<8x128xf32>
    %225 = vector.extract_strided_slice %209 {offsets = [0, 0], sizes = [8, 1], strides = [1, 1]} : vector<8x128xf32> to vector<8x1xf32>
    %226 = vector.extract_strided_slice %210 {offsets = [2, 0], sizes = [1, 128], strides = [1, 1]} : vector<8x128xf32> to vector<1x128xf32>
    %227 = vector.broadcast %225 : vector<8x1xf32> to vector<8x128xf32>
    %228 = vector.broadcast %226 : vector<1x128xf32> to vector<8x128xf32>
    %229 = arith.mulf %227, %228 : vector<8x128xf32>
    %230 = arith.addf %224, %229 : vector<8x128xf32>
    %231 = vector.extract_strided_slice %209 {offsets = [0, 1], sizes = [8, 1], strides = [1, 1]} : vector<8x128xf32> to vector<8x1xf32>
    %232 = vector.extract_strided_slice %210 {offsets = [3, 0], sizes = [1, 128], strides = [1, 1]} : vector<8x128xf32> to vector<1x128xf32>
    %233 = vector.broadcast %231 : vector<8x1xf32> to vector<8x128xf32>
    %234 = vector.broadcast %232 : vector<1x128xf32> to vector<8x128xf32>
    %235 = arith.mulf %233, %234 : vector<8x128xf32>
    %236 = arith.addf %230, %235 : vector<8x128xf32>
    %c0_79 = arith.constant 0 : index
    %c0_80 = arith.constant 0 : index
    %237 = vector.load %arg10[%c0_79, %c0_80] : memref<8x128xf32, #tpu.memory_space<vmem>>, vector<8x128xf32>
    tpu.vector_store %arg10[%c0_79, %c0_80], %236 {strides = array<i32>} : memref<8x128xf32, #tpu.memory_space<vmem>>, vector<8x128xf32>,
    %c0_81 = arith.constant 0 : index
    %c0_82 = arith.constant 0 : index
    %238 = vector.load %arg6[%c0_81, %c0_82] : memref<424x128xf32, #tpu.memory_space<vmem>>, vector<2x128xf32>
    %239 = vector.extract_strided_slice %236 {offsets = [0, 0], sizes = [8, 1], strides = [1, 1]} : vector<8x128xf32> to vector<8x1xf32>
    %240 = vector.extract_strided_slice %238 {offsets = [0, 0], sizes = [1, 128], strides = [1, 1]} : vector<2x128xf32> to vector<1x128xf32>
    %241 = vector.broadcast %239 : vector<8x1xf32> to vector<8x128xf32>
    %242 = vector.broadcast %240 : vector<1x128xf32> to vector<8x128xf32>
    %243 = arith.mulf %241, %242 : vector<8x128xf32>
    %244 = vector.extract_strided_slice %236 {offsets = [0, 1], sizes = [8, 1], strides = [1, 1]} : vector<8x128xf32> to vector<8x1xf32>
    %245 = vector.extract_strided_slice %238 {offsets = [1, 0], sizes = [1, 128], strides = [1, 1]} : vector<2x128xf32> to vector<1x128xf32>
    %246 = vector.broadcast %244 : vector<8x1xf32> to vector<8x128xf32>
    %247 = vector.broadcast %245 : vector<1x128xf32> to vector<8x128xf32>
    %248 = arith.mulf %246, %247 : vector<8x128xf32>
    %249 = arith.addf %243, %248 : vector<8x128xf32>
    %c8 = arith.constant 8 : index
    %c0_83 = arith.constant 0 : index
    %250 = vector.load %arg6[%c8, %c0_83] : memref<424x128xf32, #tpu.memory_space<vmem>>, vector<3x128xf32>
    %251 = vector.extract_strided_slice %250 {offsets = [0, 0], sizes = [1, 128], strides = [1, 1]} : vector<3x128xf32> to vector<1x128xf32>
    %252 = vector.broadcast %251 : vector<1x128xf32> to vector<8x128xf32>
    %253 = arith.addf %249, %252 : vector<8x128xf32>
    %cst_84 = arith.constant dense<0.000000e+00> : vector<128xf32>
    %254 = vector.multi_reduction <add>, %253, %cst_84 [0] : vector<8x128xf32> to vector<128xf32>
    %255 = vector.shape_cast %254 : vector<128xf32> to vector<1x128xf32>
    %cst_85 = arith.constant 8.000000e+00 : f32
    %256 = vector.broadcast %cst_85 : f32 to vector<1x128xf32>
    %257 = arith.divf %255, %256 : vector<1x128xf32>
    %258 = vector.broadcast %257 : vector<1x128xf32> to vector<8x128xf32>
    %259 = arith.subf %253, %258 : vector<8x128xf32>
    %260 = arith.mulf %259, %259 : vector<8x128xf32>
    %cst_86 = arith.constant dense<0.000000e+00> : vector<128xf32>
    %261 = vector.multi_reduction <add>, %260, %cst_86 [0] : vector<8x128xf32> to vector<128xf32>
    %262 = vector.shape_cast %261 : vector<128xf32> to vector<1x128xf32>
    %cst_87 = arith.constant 8.000000e+00 : f32
    %263 = vector.broadcast %cst_87 : f32 to vector<1x128xf32>
    %264 = arith.divf %262, %263 : vector<1x128xf32>
    %cst_88 = arith.constant 9.99999974E-6 : f32
    %265 = vector.broadcast %cst_88 : f32 to vector<1x128xf32>
    %266 = arith.addf %264, %265 : vector<1x128xf32>
    %267 = math.rsqrt %266 : vector<1x128xf32>
    %268 = vector.broadcast %267 : vector<1x128xf32> to vector<8x128xf32>
    %269 = arith.mulf %259, %268 : vector<8x128xf32>
    %270 = vector.extract_strided_slice %250 {offsets = [1, 0], sizes = [1, 128], strides = [1, 1]} : vector<3x128xf32> to vector<1x128xf32>
    %271 = vector.broadcast %270 : vector<1x128xf32> to vector<8x128xf32>
    %272 = arith.mulf %269, %271 : vector<8x128xf32>
    %273 = vector.extract_strided_slice %250 {offsets = [2, 0], sizes = [1, 128], strides = [1, 1]} : vector<3x128xf32> to vector<1x128xf32>
    %274 = vector.broadcast %273 : vector<1x128xf32> to vector<8x128xf32>
    %275 = arith.addf %272, %274 : vector<8x128xf32>
    %cst_89 = arith.constant 0.000000e+00 : f32
    %276 = vector.broadcast %cst_89 : f32 to vector<8x128xf32>
    %277 = arith.cmpf oge, %275, %276 : vector<8x128xf32>
    %cst_90 = arith.constant 2.000000e-01 : f32
    %278 = vector.broadcast %cst_90 : f32 to vector<8x128xf32>
    %279 = arith.mulf %278, %275 : vector<8x128xf32>
    %280 = arith.select %277, %275, %279 : vector<8x128xi1>, vector<8x128xf32>
    %c16 = arith.constant 16 : index
    %c0_91 = arith.constant 0 : index
    %281 = vector.load %arg6[%c16, %c0_91] : memref<424x128xf32, #tpu.memory_space<vmem>>, vector<128x128xf32>
    %cst_92 = arith.constant dense<0.000000e+00> : vector<8x128xf32>
    %282 = tpu.matmul %280, %281, %cst_92 {dimension_numbers = #tpu.dot_dimension_numbers<[1], [0], [0], [1], [0, 0, 1, 1], [], []>} : vector<8x128xf32>, vector<128x128xf32>, vector<8x128xf32> -> vector<8x128xf32>
    %c144 = arith.constant 144 : index
    %c0_93 = arith.constant 0 : index
    %283 = vector.load %arg6[%c144, %c0_93] : memref<424x128xf32, #tpu.memory_space<vmem>>, vector<3x128xf32>
    %284 = vector.extract_strided_slice %283 {offsets = [0, 0], sizes = [1, 128], strides = [1, 1]} : vector<3x128xf32> to vector<1x128xf32>
    %285 = vector.broadcast %284 : vector<1x128xf32> to vector<8x128xf32>
    %286 = arith.addf %282, %285 : vector<8x128xf32>
    %cst_94 = arith.constant dense<0.000000e+00> : vector<128xf32>
    %287 = vector.multi_reduction <add>, %286, %cst_94 [0] : vector<8x128xf32> to vector<128xf32>
    %288 = vector.shape_cast %287 : vector<128xf32> to vector<1x128xf32>
    %cst_95 = arith.constant 8.000000e+00 : f32
    %289 = vector.broadcast %cst_95 : f32 to vector<1x128xf32>
    %290 = arith.divf %288, %289 : vector<1x128xf32>
    %291 = vector.broadcast %290 : vector<1x128xf32> to vector<8x128xf32>
    %292 = arith.subf %286, %291 : vector<8x128xf32>
    %293 = arith.mulf %292, %292 : vector<8x128xf32>
    %cst_96 = arith.constant dense<0.000000e+00> : vector<128xf32>
    %294 = vector.multi_reduction <add>, %293, %cst_96 [0] : vector<8x128xf32> to vector<128xf32>
    %295 = vector.shape_cast %294 : vector<128xf32> to vector<1x128xf32>
    %cst_97 = arith.constant 8.000000e+00 : f32
    %296 = vector.broadcast %cst_97 : f32 to vector<1x128xf32>
    %297 = arith.divf %295, %296 : vector<1x128xf32>
    %cst_98 = arith.constant 9.99999974E-6 : f32
    %298 = vector.broadcast %cst_98 : f32 to vector<1x128xf32>
    %299 = arith.addf %297, %298 : vector<1x128xf32>
    %300 = math.rsqrt %299 : vector<1x128xf32>
    %301 = vector.broadcast %300 : vector<1x128xf32> to vector<8x128xf32>
    %302 = arith.mulf %292, %301 : vector<8x128xf32>
    %303 = vector.extract_strided_slice %283 {offsets = [1, 0], sizes = [1, 128], strides = [1, 1]} : vector<3x128xf32> to vector<1x128xf32>
    %304 = vector.broadcast %303 : vector<1x128xf32> to vector<8x128xf32>
    %305 = arith.mulf %302, %304 : vector<8x128xf32>
    %306 = vector.extract_strided_slice %283 {offsets = [2, 0], sizes = [1, 128], strides = [1, 1]} : vector<3x128xf32> to vector<1x128xf32>
    %307 = vector.broadcast %306 : vector<1x128xf32> to vector<8x128xf32>
    %308 = arith.addf %305, %307 : vector<8x128xf32>
    %cst_99 = arith.constant 0.000000e+00 : f32
    %309 = vector.broadcast %cst_99 : f32 to vector<8x128xf32>
    %310 = arith.cmpf oge, %308, %309 : vector<8x128xf32>
    %cst_100 = arith.constant 2.000000e-01 : f32
    %311 = vector.broadcast %cst_100 : f32 to vector<8x128xf32>
    %312 = arith.mulf %311, %308 : vector<8x128xf32>
    %313 = arith.select %310, %308, %312 : vector<8x128xi1>, vector<8x128xf32>
    %c152 = arith.constant 152 : index
    %c0_101 = arith.constant 0 : index
    %314 = vector.load %arg6[%c152, %c0_101] : memref<424x128xf32, #tpu.memory_space<vmem>>, vector<128x128xf32>
    %cst_102 = arith.constant dense<0.000000e+00> : vector<8x128xf32>
    %315 = tpu.matmul %313, %314, %cst_102 {dimension_numbers = #tpu.dot_dimension_numbers<[1], [0], [0], [1], [0, 0, 1, 1], [], []>} : vector<8x128xf32>, vector<128x128xf32>, vector<8x128xf32> -> vector<8x128xf32>
    %c280 = arith.constant 280 : index
    %c0_103 = arith.constant 0 : index
    %316 = vector.load %arg6[%c280, %c0_103] : memref<424x128xf32, #tpu.memory_space<vmem>>, vector<3x128xf32>
    %317 = vector.extract_strided_slice %316 {offsets = [0, 0], sizes = [1, 128], strides = [1, 1]} : vector<3x128xf32> to vector<1x128xf32>
    %318 = vector.broadcast %317 : vector<1x128xf32> to vector<8x128xf32>
    %319 = arith.addf %315, %318 : vector<8x128xf32>
    %cst_104 = arith.constant dense<0.000000e+00> : vector<128xf32>
    %320 = vector.multi_reduction <add>, %319, %cst_104 [0] : vector<8x128xf32> to vector<128xf32>
    %321 = vector.shape_cast %320 : vector<128xf32> to vector<1x128xf32>
    %cst_105 = arith.constant 8.000000e+00 : f32
    %322 = vector.broadcast %cst_105 : f32 to vector<1x128xf32>
    %323 = arith.divf %321, %322 : vector<1x128xf32>
    %324 = vector.broadcast %323 : vector<1x128xf32> to vector<8x128xf32>
    %325 = arith.subf %319, %324 : vector<8x128xf32>
    %326 = arith.mulf %325, %325 : vector<8x128xf32>
    %cst_106 = arith.constant dense<0.000000e+00> : vector<128xf32>
    %327 = vector.multi_reduction <add>, %326, %cst_106 [0] : vector<8x128xf32> to vector<128xf32>
    %328 = vector.shape_cast %327 : vector<128xf32> to vector<1x128xf32>
    %cst_107 = arith.constant 8.000000e+00 : f32
    %329 = vector.broadcast %cst_107 : f32 to vector<1x128xf32>
    %330 = arith.divf %328, %329 : vector<1x128xf32>
    %cst_108 = arith.constant 9.99999974E-6 : f32
    %331 = vector.broadcast %cst_108 : f32 to vector<1x128xf32>
    %332 = arith.addf %330, %331 : vector<1x128xf32>
    %333 = math.rsqrt %332 : vector<1x128xf32>
    %334 = vector.broadcast %333 : vector<1x128xf32> to vector<8x128xf32>
    %335 = arith.mulf %325, %334 : vector<8x128xf32>
    %336 = vector.extract_strided_slice %316 {offsets = [1, 0], sizes = [1, 128], strides = [1, 1]} : vector<3x128xf32> to vector<1x128xf32>
    %337 = vector.broadcast %336 : vector<1x128xf32> to vector<8x128xf32>
    %338 = arith.mulf %335, %337 : vector<8x128xf32>
    %339 = vector.extract_strided_slice %316 {offsets = [2, 0], sizes = [1, 128], strides = [1, 1]} : vector<3x128xf32> to vector<1x128xf32>
    %340 = vector.broadcast %339 : vector<1x128xf32> to vector<8x128xf32>
    %341 = arith.addf %338, %340 : vector<8x128xf32>
    %cst_109 = arith.constant 0.000000e+00 : f32
    %342 = vector.broadcast %cst_109 : f32 to vector<8x128xf32>
    %343 = arith.cmpf oge, %341, %342 : vector<8x128xf32>
    %cst_110 = arith.constant 2.000000e-01 : f32
    %344 = vector.broadcast %cst_110 : f32 to vector<8x128xf32>
    %345 = arith.mulf %344, %341 : vector<8x128xf32>
    %346 = arith.select %343, %341, %345 : vector<8x128xi1>, vector<8x128xf32>
    %c288 = arith.constant 288 : index
    %c0_111 = arith.constant 0 : index
    %347 = vector.load %arg6[%c288, %c0_111] : memref<424x128xf32, #tpu.memory_space<vmem>>, vector<128x128xf32>
    %cst_112 = arith.constant dense<0.000000e+00> : vector<8x128xf32>
    %348 = tpu.matmul %346, %347, %cst_112 {dimension_numbers = #tpu.dot_dimension_numbers<[1], [0], [0], [1], [0, 0, 1, 1], [], []>} : vector<8x128xf32>, vector<128x128xf32>, vector<8x128xf32> -> vector<8x128xf32>
    %c416 = arith.constant 416 : index
    %c0_113 = arith.constant 0 : index
    %349 = vector.load %arg6[%c416, %c0_113] : memref<424x128xf32, #tpu.memory_space<vmem>>, vector<1x128xf32>
    %350 = vector.broadcast %349 : vector<1x128xf32> to vector<8x128xf32>
    %351 = arith.addf %348, %350 : vector<8x128xf32>
    %c0_114 = arith.constant 0 : index
    %c0_115 = arith.constant 0 : index
    %352 = vector.load %arg8[%c0_114, %c0_115] : memref<8x128xf32, #tpu.memory_space<vmem>>, vector<8x128xf32>
    tpu.vector_store %arg8[%c0_114, %c0_115], %351 {strides = array<i32>} : memref<8x128xf32, #tpu.memory_space<vmem>>, vector<8x128xf32>,
    %c0_116 = arith.constant 0 : index
    %c0_117 = arith.constant 0 : index
    %353 = vector.load %arg7[%c0_116, %c0_117] : memref<424x128xf32, #tpu.memory_space<vmem>>, vector<2x128xf32>
    %354 = vector.extract_strided_slice %236 {offsets = [0, 0], sizes = [8, 1], strides = [1, 1]} : vector<8x128xf32> to vector<8x1xf32>
    %355 = vector.extract_strided_slice %353 {offsets = [0, 0], sizes = [1, 128], strides = [1, 1]} : vector<2x128xf32> to vector<1x128xf32>
    %356 = vector.broadcast %354 : vector<8x1xf32> to vector<8x128xf32>
    %357 = vector.broadcast %355 : vector<1x128xf32> to vector<8x128xf32>
    %358 = arith.mulf %356, %357 : vector<8x128xf32>
    %359 = vector.extract_strided_slice %236 {offsets = [0, 1], sizes = [8, 1], strides = [1, 1]} : vector<8x128xf32> to vector<8x1xf32>
    %360 = vector.extract_strided_slice %353 {offsets = [1, 0], sizes = [1, 128], strides = [1, 1]} : vector<2x128xf32> to vector<1x128xf32>
    %361 = vector.broadcast %359 : vector<8x1xf32> to vector<8x128xf32>
    %362 = vector.broadcast %360 : vector<1x128xf32> to vector<8x128xf32>
    %363 = arith.mulf %361, %362 : vector<8x128xf32>
    %364 = arith.addf %358, %363 : vector<8x128xf32>
    %c8_118 = arith.constant 8 : index
    %c0_119 = arith.constant 0 : index
    %365 = vector.load %arg7[%c8_118, %c0_119] : memref<424x128xf32, #tpu.memory_space<vmem>>, vector<3x128xf32>
    %366 = vector.extract_strided_slice %365 {offsets = [0, 0], sizes = [1, 128], strides = [1, 1]} : vector<3x128xf32> to vector<1x128xf32>
    %367 = vector.broadcast %366 : vector<1x128xf32> to vector<8x128xf32>
    %368 = arith.addf %364, %367 : vector<8x128xf32>
    %cst_120 = arith.constant dense<0.000000e+00> : vector<128xf32>
    %369 = vector.multi_reduction <add>, %368, %cst_120 [0] : vector<8x128xf32> to vector<128xf32>
    %370 = vector.shape_cast %369 : vector<128xf32> to vector<1x128xf32>
    %cst_121 = arith.constant 8.000000e+00 : f32
    %371 = vector.broadcast %cst_121 : f32 to vector<1x128xf32>
    %372 = arith.divf %370, %371 : vector<1x128xf32>
    %373 = vector.broadcast %372 : vector<1x128xf32> to vector<8x128xf32>
    %374 = arith.subf %368, %373 : vector<8x128xf32>
    %375 = arith.mulf %374, %374 : vector<8x128xf32>
    %cst_122 = arith.constant dense<0.000000e+00> : vector<128xf32>
    %376 = vector.multi_reduction <add>, %375, %cst_122 [0] : vector<8x128xf32> to vector<128xf32>
    %377 = vector.shape_cast %376 : vector<128xf32> to vector<1x128xf32>
    %cst_123 = arith.constant 8.000000e+00 : f32
    %378 = vector.broadcast %cst_123 : f32 to vector<1x128xf32>
    %379 = arith.divf %377, %378 : vector<1x128xf32>
    %cst_124 = arith.constant 9.99999974E-6 : f32
    %380 = vector.broadcast %cst_124 : f32 to vector<1x128xf32>
    %381 = arith.addf %379, %380 : vector<1x128xf32>
    %382 = math.rsqrt %381 : vector<1x128xf32>
    %383 = vector.broadcast %382 : vector<1x128xf32> to vector<8x128xf32>
    %384 = arith.mulf %374, %383 : vector<8x128xf32>
    %385 = vector.extract_strided_slice %365 {offsets = [1, 0], sizes = [1, 128], strides = [1, 1]} : vector<3x128xf32> to vector<1x128xf32>
    %386 = vector.broadcast %385 : vector<1x128xf32> to vector<8x128xf32>
    %387 = arith.mulf %384, %386 : vector<8x128xf32>
    %388 = vector.extract_strided_slice %365 {offsets = [2, 0], sizes = [1, 128], strides = [1, 1]} : vector<3x128xf32> to vector<1x128xf32>
    %389 = vector.broadcast %388 : vector<1x128xf32> to vector<8x128xf32>
    %390 = arith.addf %387, %389 : vector<8x128xf32>
    %cst_125 = arith.constant 0.000000e+00 : f32
    %391 = vector.broadcast %cst_125 : f32 to vector<8x128xf32>
    %392 = arith.cmpf oge, %390, %391 : vector<8x128xf32>
    %cst_126 = arith.constant 2.000000e-01 : f32
    %393 = vector.broadcast %cst_126 : f32 to vector<8x128xf32>
    %394 = arith.mulf %393, %390 : vector<8x128xf32>
    %395 = arith.select %392, %390, %394 : vector<8x128xi1>, vector<8x128xf32>
    %c16_127 = arith.constant 16 : index
    %c0_128 = arith.constant 0 : index
    %396 = vector.load %arg7[%c16_127, %c0_128] : memref<424x128xf32, #tpu.memory_space<vmem>>, vector<128x128xf32>
    %cst_129 = arith.constant dense<0.000000e+00> : vector<8x128xf32>
    %397 = tpu.matmul %395, %396, %cst_129 {dimension_numbers = #tpu.dot_dimension_numbers<[1], [0], [0], [1], [0, 0, 1, 1], [], []>} : vector<8x128xf32>, vector<128x128xf32>, vector<8x128xf32> -> vector<8x128xf32>
    %c144_130 = arith.constant 144 : index
    %c0_131 = arith.constant 0 : index
    %398 = vector.load %arg7[%c144_130, %c0_131] : memref<424x128xf32, #tpu.memory_space<vmem>>, vector<3x128xf32>
    %399 = vector.extract_strided_slice %398 {offsets = [0, 0], sizes = [1, 128], strides = [1, 1]} : vector<3x128xf32> to vector<1x128xf32>
    %400 = vector.broadcast %399 : vector<1x128xf32> to vector<8x128xf32>
    %401 = arith.addf %397, %400 : vector<8x128xf32>
    %cst_132 = arith.constant dense<0.000000e+00> : vector<128xf32>
    %402 = vector.multi_reduction <add>, %401, %cst_132 [0] : vector<8x128xf32> to vector<128xf32>
    %403 = vector.shape_cast %402 : vector<128xf32> to vector<1x128xf32>
    %cst_133 = arith.constant 8.000000e+00 : f32
    %404 = vector.broadcast %cst_133 : f32 to vector<1x128xf32>
    %405 = arith.divf %403, %404 : vector<1x128xf32>
    %406 = vector.broadcast %405 : vector<1x128xf32> to vector<8x128xf32>
    %407 = arith.subf %401, %406 : vector<8x128xf32>
    %408 = arith.mulf %407, %407 : vector<8x128xf32>
    %cst_134 = arith.constant dense<0.000000e+00> : vector<128xf32>
    %409 = vector.multi_reduction <add>, %408, %cst_134 [0] : vector<8x128xf32> to vector<128xf32>
    %410 = vector.shape_cast %409 : vector<128xf32> to vector<1x128xf32>
    %cst_135 = arith.constant 8.000000e+00 : f32
    %411 = vector.broadcast %cst_135 : f32 to vector<1x128xf32>
    %412 = arith.divf %410, %411 : vector<1x128xf32>
    %cst_136 = arith.constant 9.99999974E-6 : f32
    %413 = vector.broadcast %cst_136 : f32 to vector<1x128xf32>
    %414 = arith.addf %412, %413 : vector<1x128xf32>
    %415 = math.rsqrt %414 : vector<1x128xf32>
    %416 = vector.broadcast %415 : vector<1x128xf32> to vector<8x128xf32>
    %417 = arith.mulf %407, %416 : vector<8x128xf32>
    %418 = vector.extract_strided_slice %398 {offsets = [1, 0], sizes = [1, 128], strides = [1, 1]} : vector<3x128xf32> to vector<1x128xf32>
    %419 = vector.broadcast %418 : vector<1x128xf32> to vector<8x128xf32>
    %420 = arith.mulf %417, %419 : vector<8x128xf32>
    %421 = vector.extract_strided_slice %398 {offsets = [2, 0], sizes = [1, 128], strides = [1, 1]} : vector<3x128xf32> to vector<1x128xf32>
    %422 = vector.broadcast %421 : vector<1x128xf32> to vector<8x128xf32>
    %423 = arith.addf %420, %422 : vector<8x128xf32>
    %cst_137 = arith.constant 0.000000e+00 : f32
    %424 = vector.broadcast %cst_137 : f32 to vector<8x128xf32>
    %425 = arith.cmpf oge, %423, %424 : vector<8x128xf32>
    %cst_138 = arith.constant 2.000000e-01 : f32
    %426 = vector.broadcast %cst_138 : f32 to vector<8x128xf32>
    %427 = arith.mulf %426, %423 : vector<8x128xf32>
    %428 = arith.select %425, %423, %427 : vector<8x128xi1>, vector<8x128xf32>
    %c152_139 = arith.constant 152 : index
    %c0_140 = arith.constant 0 : index
    %429 = vector.load %arg7[%c152_139, %c0_140] : memref<424x128xf32, #tpu.memory_space<vmem>>, vector<128x128xf32>
    %cst_141 = arith.constant dense<0.000000e+00> : vector<8x128xf32>
    %430 = tpu.matmul %428, %429, %cst_141 {dimension_numbers = #tpu.dot_dimension_numbers<[1], [0], [0], [1], [0, 0, 1, 1], [], []>} : vector<8x128xf32>, vector<128x128xf32>, vector<8x128xf32> -> vector<8x128xf32>
    %c280_142 = arith.constant 280 : index
    %c0_143 = arith.constant 0 : index
    %431 = vector.load %arg7[%c280_142, %c0_143] : memref<424x128xf32, #tpu.memory_space<vmem>>, vector<3x128xf32>
    %432 = vector.extract_strided_slice %431 {offsets = [0, 0], sizes = [1, 128], strides = [1, 1]} : vector<3x128xf32> to vector<1x128xf32>
    %433 = vector.broadcast %432 : vector<1x128xf32> to vector<8x128xf32>
    %434 = arith.addf %430, %433 : vector<8x128xf32>
    %cst_144 = arith.constant dense<0.000000e+00> : vector<128xf32>
    %435 = vector.multi_reduction <add>, %434, %cst_144 [0] : vector<8x128xf32> to vector<128xf32>
    %436 = vector.shape_cast %435 : vector<128xf32> to vector<1x128xf32>
    %cst_145 = arith.constant 8.000000e+00 : f32
    %437 = vector.broadcast %cst_145 : f32 to vector<1x128xf32>
    %438 = arith.divf %436, %437 : vector<1x128xf32>
    %439 = vector.broadcast %438 : vector<1x128xf32> to vector<8x128xf32>
    %440 = arith.subf %434, %439 : vector<8x128xf32>
    %441 = arith.mulf %440, %440 : vector<8x128xf32>
    %cst_146 = arith.constant dense<0.000000e+00> : vector<128xf32>
    %442 = vector.multi_reduction <add>, %441, %cst_146 [0] : vector<8x128xf32> to vector<128xf32>
    %443 = vector.shape_cast %442 : vector<128xf32> to vector<1x128xf32>
    %cst_147 = arith.constant 8.000000e+00 : f32
    %444 = vector.broadcast %cst_147 : f32 to vector<1x128xf32>
    %445 = arith.divf %443, %444 : vector<1x128xf32>
    %cst_148 = arith.constant 9.99999974E-6 : f32
    %446 = vector.broadcast %cst_148 : f32 to vector<1x128xf32>
    %447 = arith.addf %445, %446 : vector<1x128xf32>
    %448 = math.rsqrt %447 : vector<1x128xf32>
    %449 = vector.broadcast %448 : vector<1x128xf32> to vector<8x128xf32>
    %450 = arith.mulf %440, %449 : vector<8x128xf32>
    %451 = vector.extract_strided_slice %431 {offsets = [1, 0], sizes = [1, 128], strides = [1, 1]} : vector<3x128xf32> to vector<1x128xf32>
    %452 = vector.broadcast %451 : vector<1x128xf32> to vector<8x128xf32>
    %453 = arith.mulf %450, %452 : vector<8x128xf32>
    %454 = vector.extract_strided_slice %431 {offsets = [2, 0], sizes = [1, 128], strides = [1, 1]} : vector<3x128xf32> to vector<1x128xf32>
    %455 = vector.broadcast %454 : vector<1x128xf32> to vector<8x128xf32>
    %456 = arith.addf %453, %455 : vector<8x128xf32>
    %cst_149 = arith.constant 0.000000e+00 : f32
    %457 = vector.broadcast %cst_149 : f32 to vector<8x128xf32>
    %458 = arith.cmpf oge, %456, %457 : vector<8x128xf32>
    %cst_150 = arith.constant 2.000000e-01 : f32
    %459 = vector.broadcast %cst_150 : f32 to vector<8x128xf32>
    %460 = arith.mulf %459, %456 : vector<8x128xf32>
    %461 = arith.select %458, %456, %460 : vector<8x128xi1>, vector<8x128xf32>
    %c288_151 = arith.constant 288 : index
    %c0_152 = arith.constant 0 : index
    %462 = vector.load %arg7[%c288_151, %c0_152] : memref<424x128xf32, #tpu.memory_space<vmem>>, vector<128x128xf32>
    %cst_153 = arith.constant dense<0.000000e+00> : vector<8x128xf32>
    %463 = tpu.matmul %461, %462, %cst_153 {dimension_numbers = #tpu.dot_dimension_numbers<[1], [0], [0], [1], [0, 0, 1, 1], [], []>} : vector<8x128xf32>, vector<128x128xf32>, vector<8x128xf32> -> vector<8x128xf32>
    %c416_154 = arith.constant 416 : index
    %c0_155 = arith.constant 0 : index
    %464 = vector.load %arg7[%c416_154, %c0_155] : memref<424x128xf32, #tpu.memory_space<vmem>>, vector<1x128xf32>
    %465 = vector.broadcast %464 : vector<1x128xf32> to vector<8x128xf32>
    %466 = arith.addf %463, %465 : vector<8x128xf32>
    %c0_156 = arith.constant 0 : index
    %c0_157 = arith.constant 0 : index
    %467 = vector.load %arg9[%c0_156, %c0_157] : memref<8x128xf32, #tpu.memory_space<vmem>>, vector<8x128xf32>
    tpu.vector_store %arg9[%c0_156, %c0_157], %466 {strides = array<i32>} : memref<8x128xf32, #tpu.memory_space<vmem>>, vector<8x128xf32>,
    return
  }
  func.func @transform_0(%arg0: i32) -> (i32, i32) {
    %c0_i32 = arith.constant 0 : i32
    %c0_i32_0 = arith.constant 0 : i32
    return %arg0, %c0_i32 : i32, i32
  }
  func.func @transform_1(%arg0: i32) -> (i32, i32) {
    %c0_i32 = arith.constant 0 : i32
    %c0_i32_0 = arith.constant 0 : i32
    return %arg0, %c0_i32 : i32, i32
  }
  func.func @transform_2(%arg0: i32) -> (i32, i32) {
    %c0_i32 = arith.constant 0 : i32
    %c0_i32_0 = arith.constant 0 : i32
    %c0_i32_1 = arith.constant 0 : i32
    return %c0_i32, %c0_i32_0 : i32, i32
  }
  func.func @transform_3(%arg0: i32) -> (i32, i32) {
    %c0_i32 = arith.constant 0 : i32
    %c0_i32_0 = arith.constant 0 : i32
    %c0_i32_1 = arith.constant 0 : i32
    return %c0_i32, %c0_i32_0 : i32, i32
  }
  func.func @transform_4(%arg0: i32) -> (i32, i32) {
    %c0_i32 = arith.constant 0 : i32
    %c0_i32_0 = arith.constant 0 : i32
    %c0_i32_1 = arith.constant 0 : i32
    return %c0_i32, %c0_i32_0 : i32, i32
  }
  func.func @transform_5(%arg0: i32) -> (i32, i32) {
    %c0_i32 = arith.constant 0 : i32
    %c0_i32_0 = arith.constant 0 : i32
    %c0_i32_1 = arith.constant 0 : i32
    return %c0_i32, %c0_i32_0 : i32, i32
  }
  func.func @transform_6(%arg0: i32) -> (i32, i32) {
    %c0_i32 = arith.constant 0 : i32
    %c0_i32_0 = arith.constant 0 : i32
    %c0_i32_1 = arith.constant 0 : i32
    return %c0_i32, %c0_i32_0 : i32, i32
  }
  func.func @transform_7(%arg0: i32) -> (i32, i32) {
    %c0_i32 = arith.constant 0 : i32
    %c0_i32_0 = arith.constant 0 : i32
    return %arg0, %c0_i32 : i32, i32
  }
  func.func @transform_8(%arg0: i32) -> (i32, i32) {
    %c0_i32 = arith.constant 0 : i32
    %c0_i32_0 = arith.constant 0 : i32
    return %arg0, %c0_i32 : i32, i32
  }
  func.func @transform_9(%arg0: i32) -> (i32, i32) {
    %c0_i32 = arith.constant 0 : i32
    %c0_i32_0 = arith.constant 0 : i32
    return %arg0, %c0_i32 : i32, i32
  }
}

</mosaic_0001>

<llo_original>
// kernel: tpu_custom_call.1
$region0: #{tpu_custom_call.1}
  #allocation0 [shape = 'u32[]', space=smem, size = 0x4, offset = 0x4, fixed_abs, tag = 'smem constant byte address 0x4 - core index']
  #allocation1 [shape = 'u32[72,128]{1,0:T(1,128)}', space=vmem, size = 0x9000, scoped, tag = 'internal scratch']
  %s0 = inlined_call_operand.hbm [shape: f32[32,128], index: 0, kind: input, shape index: {}]
  %s1 = inlined_call_operand.hbm [shape: f32[32,128], index: 1, kind: input, shape index: {}]
  %s2 = inlined_call_operand.hbm [shape: f32[544,128], index: 2, kind: input, shape index: {}]
  %s3 = inlined_call_operand.hbm [shape: f32[544,128], index: 3, kind: input, shape index: {}]
  %s4 = inlined_call_operand.hbm [shape: f32[8,128], index: 4, kind: input, shape index: {}]
  %s5 = inlined_call_operand.hbm [shape: f32[424,128], index: 5, kind: input, shape index: {}]
  %s6 = inlined_call_operand.hbm [shape: f32[424,128], index: 6, kind: input, shape index: {}]
  %s7 = inlined_call_operand.hbm [shape: f32[32,128], index: 7, kind: output, shape index: {0}]
  %s8 = inlined_call_operand.hbm [shape: f32[32,128], index: 8, kind: output, shape index: {1}]
  %s9 = inlined_call_operand.hbm [shape: f32[32,128], index: 9, kind: output, shape index: {2}]
  %10 = xla_tuple %s7, %s8, %s9
  %s11 = sld [smem:[#allocation0]]
  $region105: #{tpu_custom_call.1} parent=0
    _
  %s13 = ssub.s32 1, %s11
  %s14 = scalar_select 0, %s13, %s11
  $region1: #{tpu_custom_call.1} parent=0
    #allocation2 [shape = 'u8[8192]{0}', space=vmem, size = 0x2000, scoped, tag = 'input window, operand 0']
    #allocation3 [shape = 's32[2]{0}', space=sflag, size = 0x8, scoped, tag = 'scoped memory for tpu_custom_call.1']
    #allocation4 [shape = 's32[2]{0}', space=sflag, size = 0x8, scoped, tag = 'scoped memory for tpu_custom_call.1']
    #allocation5 [shape = 'u8[8192]{0}', space=vmem, size = 0x2000, scoped, tag = 'input window, operand 1']
    #allocation6 [shape = 's32[2]{0}', space=sflag, size = 0x8, scoped, tag = 'scoped memory for tpu_custom_call.1']
    #allocation7 [shape = 'u8[278528]{0}', space=vmem, size = 0x44000, scoped, tag = 'input window, operand 2, single buffered']
    #allocation8 [shape = 'u8[278528]{0}', space=vmem, size = 0x44000, scoped, tag = 'input window, operand 3, single buffered']
    #allocation9 [shape = 's32[1]{0}', space=sflag, size = 0x4, scoped, tag = 'scoped memory for tpu_custom_call.1']
    #allocation10 [shape = 'u8[4096]{0}', space=vmem, size = 0x1000, scoped, tag = 'input window, operand 4, single buffered']
    #allocation11 [shape = 'u8[217088]{0}', space=vmem, size = 0x35000, scoped, tag = 'input window, operand 5, single buffered']
    #allocation12 [shape = 's32[1]{0}', space=sflag, size = 0x4, scoped, tag = 'scoped memory for tpu_custom_call.1']
    #allocation13 [shape = 'u8[217088]{0}', space=vmem, size = 0x35000, scoped, tag = 'input window, operand 6, single buffered']
    #allocation14 [shape = 'u8[8192]{0}', space=vmem, size = 0x2000, scoped, tag = 'output window, operand 0']
    #allocation15 [shape = 'u8[8192]{0}', space=vmem, size = 0x2000, scoped, tag = 'output window, operand 1']
    #allocation16 [shape = 's32[2]{0}', space=sflag, size = 0x8, scoped, tag = 'scoped memory for tpu_custom_call.1']
    #allocation17 [shape = 'u8[8192]{0}', space=vmem, size = 0x2000, scoped, tag = 'output window, operand 2']
    %15 = vsyncpa [#allocation3], 0
    %s16 = scalar_lea.sflag [#allocation3], 1
    %17 = vsyncpa %s16, 0
    %18 = vsyncpa [#allocation6], 0
    %s19 = scalar_lea.sflag [#allocation6], 1
    %20 = vsyncpa %s19, 0
    %21 = vsyncpa [#allocation9], 0
    %22 = vsyncpa [#allocation12], 0
    %23 = vsyncpa [#allocation4], 0
    %s24 = scalar_lea.sflag [#allocation4], 1
    %25 = vsyncpa %s24, 0
    %26 = vsyncpa [#allocation16], 0
    %s27 = scalar_lea.sflag [#allocation16], 1
    %28 = vsyncpa %s27, 0
    loop: start=0, step=1, limit=6
    $region2: #{tpu_custom_call.1} parent=1 // loop_pre_header
      _
    $region3: #{tpu_custom_call.1} parent=1 // loop_header
      %s30 = sphi 0, %s34
      %p31 = scmp.ge.s32.totalorder %s30, 6
      %s40 = sphi 0, %s42
      %s43 = sphi 0, %s40
      %s44 = sphi 0, %s43
      %s60 = sphi 0, %s44
      %s66 = sphi 0, %s68
      %s69 = sphi 0, %s66
      %s70 = sphi 0, %s69
      %s86 = sphi 0, %s70
      %s90 = sphi 0, %s90
      %s92 = sphi 0, %s90
      %s93 = sphi 0, %s92
      %s107 = sphi 0, %s93
      %s111 = sphi 0, %s111
      %s113 = sphi 0, %s111
      %s114 = sphi 0, %s113
      %s128 = sphi 0, %s114
      %s132 = sphi 0, %s132
      %s134 = sphi 0, %s132
      %s135 = sphi 0, %s134
      %s149 = sphi 0, %s135
      %s153 = sphi 0, %s153
      %s155 = sphi 0, %s153
      %s156 = sphi 0, %s155
      %s170 = sphi 0, %s156
      %s174 = sphi 0, %s174
      %s176 = sphi 0, %s174
      %s177 = sphi 0, %s176
      %s191 = sphi 0, %s177
      %s197 = sphi 0, %s199
      %s200 = sphi 0, %s197
      %s201 = sphi 0, %s200
      %s217 = sphi 0, %s201
      %s223 = sphi 0, %s225
      %s226 = sphi 0, %s223
      %s227 = sphi 0, %s226
      %s243 = sphi 0, %s227
      %s249 = sphi 0, %s251
      %s252 = sphi 0, %s249
      %s253 = sphi 0, %s252
      %s269 = sphi 0, %s253
    $region4: #{tpu_custom_call.1} parent=1 // loop_header_branch
      %33 = sbr.rel (%p31) target = $region8
    $region5: #{tpu_custom_call.1} parent=1 // loop_body
      %s35 = ssub.s32 %s30, 1
      %s36 = ssub.s32 %s30, 2
      %s37 = sadd.s32 %s30, 1
      %s38 = ssub.s32 %s30, %s37
      %p39 = scmp.eq.s32.totalorder %s38, 0
      %s41 = sadd.s32 %s40, 1
      %s42 = scalar_select %p39, %s40, %s41
      %p45 = pneg %p39
      %p46 = scmp.eq.s32.totalorder %s30, 3
      %p47 = por %p45, %p46
      %p48 = scmp.ne.s32.totalorder %s40, %s43
      %p49 = scmp.eq.s32.totalorder %s30, 0
      %p50 = por %p48, %p49
      %p51 = scmp.ne.s32.totalorder %s40, %s43
      %p52 = scmp.eq.s32.totalorder %s35, 3
      %p53 = por %p51, %p52
      %p54 = scmp.ne.s32.totalorder %s43, %s44
      %p55 = scmp.eq.s32.totalorder %s35, 0
      %p56 = por %p54, %p55
      %p57 = scmp.ne.s32.totalorder %s43, %s44
      %p58 = scmp.eq.s32.totalorder %s36, 3
      %p59 = por %p57, %p58
      %p61 = scmp.ne.s32.totalorder %s44, %s60
      %p62 = scmp.eq.s32.totalorder %s36, 0
      %p63 = por %p61, %p62
      %s64 = ssub.s32 %s30, %s37
      %p65 = scmp.eq.s32.totalorder %s64, 0
      %s67 = sadd.s32 %s66, 1
      %s68 = scalar_select %p65, %s66, %s67
      %p71 = pneg %p65
      %p72 = scmp.eq.s32.totalorder %s30, 3
      %p73 = por %p71, %p72
      %p74 = scmp.ne.s32.totalorder %s66, %s69
      %p75 = scmp.eq.s32.totalorder %s30, 0
      %p76 = por %p74, %p75
      %p77 = scmp.ne.s32.totalorder %s66, %s69
      %p78 = scmp.eq.s32.totalorder %s35, 3
      %p79 = por %p77, %p78
      %p80 = scmp.ne.s32.totalorder %s69, %s70
      %p81 = scmp.eq.s32.totalorder %s35, 0
      %p82 = por %p80, %p81
      %p83 = scmp.ne.s32.totalorder %s69, %s70
      %p84 = scmp.eq.s32.totalorder %s36, 3
      %p85 = por %p83, %p84
      %p87 = scmp.ne.s32.totalorder %s70, %s86
      %p88 = scmp.eq.s32.totalorder %s36, 0
      %p89 = por %p87, %p88
      %s91 = sadd.s32 %s90, 1
      %p94 = scmp.eq.s32.totalorder %s30, 3
      %p95 = scmp.ne.s32.totalorder %s90, %s92
      %p96 = scmp.eq.s32.totalorder %s30, 0
      %p97 = por %p95, %p96
      %p98 = scmp.ne.s32.totalorder %s90, %s92
      %p99 = scmp.eq.s32.totalorder %s35, 3
      %p100 = por %p98, %p99
      %p101 = scmp.ne.s32.totalorder %s92, %s93
      %p102 = scmp.eq.s32.totalorder %s35, 0
      %p103 = por %p101, %p102
      %p104 = scmp.ne.s32.totalorder %s92, %s93
      %p105 = scmp.eq.s32.totalorder %s36, 3
      %p106 = por %p104, %p105
      %p108 = scmp.ne.s32.totalorder %s93, %s107
      %p109 = scmp.eq.s32.totalorder %s36, 0
      %p110 = por %p108, %p109
      %s112 = sadd.s32 %s111, 1
      %p115 = scmp.eq.s32.totalorder %s30, 3
      %p116 = scmp.ne.s32.totalorder %s111, %s113
      %p117 = scmp.eq.s32.totalorder %s30, 0
      %p118 = por %p116, %p117
      %p119 = scmp.ne.s32.totalorder %s111, %s113
      %p120 = scmp.eq.s32.totalorder %s35, 3
      %p121 = por %p119, %p120
      %p122 = scmp.ne.s32.totalorder %s113, %s114
      %p123 = scmp.eq.s32.totalorder %s35, 0
      %p124 = por %p122, %p123
      %p125 = scmp.ne.s32.totalorder %s113, %s114
      %p126 = scmp.eq.s32.totalorder %s36, 3
      %p127 = por %p125, %p126
      %p129 = scmp.ne.s32.totalorder %s114, %s128
      %p130 = scmp.eq.s32.totalorder %s36, 0
      %p131 = por %p129, %p130
      %s133 = sadd.s32 %s132, 1
      %p136 = scmp.eq.s32.totalorder %s30, 3
      %p137 = scmp.ne.s32.totalorder %s132, %s134
      %p138 = scmp.eq.s32.totalorder %s30, 0
      %p139 = por %p137, %p138
      %p140 = scmp.ne.s32.totalorder %s132, %s134
      %p141 = scmp.eq.s32.totalorder %s35, 3
      %p142 = por %p140, %p141
      %p143 = scmp.ne.s32.totalorder %s134, %s135
      %p144 = scmp.eq.s32.totalorder %s35, 0
      %p145 = por %p143, %p144
      %p146 = scmp.ne.s32.totalorder %s134, %s135
      %p147 = scmp.eq.s32.totalorder %s36, 3
      %p148 = por %p146, %p147
      %p150 = scmp.ne.s32.totalorder %s135, %s149
      %p151 = scmp.eq.s32.totalorder %s36, 0
      %p152 = por %p150, %p151
      %s154 = sadd.s32 %s153, 1
      %p157 = scmp.eq.s32.totalorder %s30, 3
      %p158 = scmp.ne.s32.totalorder %s153, %s155
      %p159 = scmp.eq.s32.totalorder %s30, 0
      %p160 = por %p158, %p159
      %p161 = scmp.ne.s32.totalorder %s153, %s155
      %p162 = scmp.eq.s32.totalorder %s35, 3
      %p163 = por %p161, %p162
      %p164 = scmp.ne.s32.totalorder %s155, %s156
      %p165 = scmp.eq.s32.totalorder %s35, 0
      %p166 = por %p164, %p165
      %p167 = scmp.ne.s32.totalorder %s155, %s156
      %p168 = scmp.eq.s32.totalorder %s36, 3
      %p169 = por %p167, %p168
      %p171 = scmp.ne.s32.totalorder %s156, %s170
      %p172 = scmp.eq.s32.totalorder %s36, 0
      %p173 = por %p171, %p172
      %s175 = sadd.s32 %s174, 1
      %p178 = scmp.eq.s32.totalorder %s30, 3
      %p179 = scmp.ne.s32.totalorder %s174, %s176
      %p180 = scmp.eq.s32.totalorder %s30, 0
      %p181 = por %p179, %p180
      %p182 = scmp.ne.s32.totalorder %s174, %s176
      %p183 = scmp.eq.s32.totalorder %s35, 3
      %p184 = por %p182, %p183
      %p185 = scmp.ne.s32.totalorder %s176, %s177
      %p186 = scmp.eq.s32.totalorder %s35, 0
      %p187 = por %p185, %p186
      %p188 = scmp.ne.s32.totalorder %s176, %s177
      %p189 = scmp.eq.s32.totalorder %s36, 3
      %p190 = por %p188, %p189
      %p192 = scmp.ne.s32.totalorder %s177, %s191
      %p193 = scmp.eq.s32.totalorder %s36, 0
      %p194 = por %p192, %p193
      %s195 = ssub.s32 %s30, %s37
      %p196 = scmp.eq.s32.totalorder %s195, 0
      %s198 = sadd.s32 %s197, 1
      %s199 = scalar_select %p196, %s197, %s198
      %p202 = pneg %p196
      %p203 = scmp.eq.s32.totalorder %s30, 3
      %p204 = por %p202, %p203
      %p205 = scmp.ne.s32.totalorder %s197, %s200
      %p206 = scmp.eq.s32.totalorder %s30, 0
      %p207 = por %p205, %p206
      %p208 = scmp.ne.s32.totalorder %s197, %s200
      %p209 = scmp.eq.s32.totalorder %s35, 3
      %p210 = por %p208, %p209
      %p211 = scmp.ne.s32.totalorder %s200, %s201
      %p212 = scmp.eq.s32.totalorder %s35, 0
      %p213 = por %p211, %p212
      %p214 = scmp.ne.s32.totalorder %s200, %s201
      %p215 = scmp.eq.s32.totalorder %s36, 3
      %p216 = por %p214, %p215
      %p218 = scmp.ne.s32.totalorder %s201, %s217
      %p219 = scmp.eq.s32.totalorder %s36, 0
      %p220 = por %p218, %p219
      %s221 = ssub.s32 %s30, %s37
      %p222 = scmp.eq.s32.totalorder %s221, 0
      %s224 = sadd.s32 %s223, 1
      %s225 = scalar_select %p222, %s223, %s224
      %p228 = pneg %p222
      %p229 = scmp.eq.s32.totalorder %s30, 3
      %p230 = por %p228, %p229
      %p231 = scmp.ne.s32.totalorder %s223, %s226
      %p232 = scmp.eq.s32.totalorder %s30, 0
      %p233 = por %p231, %p232
      %p234 = scmp.ne.s32.totalorder %s223, %s226
      %p235 = scmp.eq.s32.totalorder %s35, 3
      %p236 = por %p234, %p235
      %p237 = scmp.ne.s32.totalorder %s226, %s227
      %p238 = scmp.eq.s32.totalorder %s35, 0
      %p239 = por %p237, %p238
      %p240 = scmp.ne.s32.totalorder %s226, %s227
      %p241 = scmp.eq.s32.totalorder %s36, 3
      %p242 = por %p240, %p241
      %p244 = scmp.ne.s32.totalorder %s227, %s243
      %p245 = scmp.eq.s32.totalorder %s36, 0
      %p246 = por %p244, %p245
      %s247 = ssub.s32 %s30, %s37
      %p248 = scmp.eq.s32.totalorder %s247, 0
      %s250 = sadd.s32 %s249, 1
      %s251 = scalar_select %p248, %s249, %s250
      %p254 = pneg %p248
      %p255 = scmp.eq.s32.totalorder %s30, 3
      %p256 = por %p254, %p255
      %p257 = scmp.ne.s32.totalorder %s249, %s252
      %p258 = scmp.eq.s32.totalorder %s30, 0
      %p259 = por %p257, %p258
      %p260 = scmp.ne.s32.totalorder %s249, %s252
      %p261 = scmp.eq.s32.totalorder %s35, 3
      %p262 = por %p260, %p261
      %p263 = scmp.ne.s32.totalorder %s252, %s253
      %p264 = scmp.eq.s32.totalorder %s35, 0
      %p265 = por %p263, %p264
      %p266 = scmp.ne.s32.totalorder %s252, %s253
      %p267 = scmp.eq.s32.totalorder %s36, 3
      %p268 = por %p266, %p267
      %p270 = scmp.ne.s32.totalorder %s253, %s269
      %p271 = scmp.eq.s32.totalorder %s36, 0
      %p272 = por %p270, %p271
      %p273 = scmp.le.s32.totalorder 1, %s30
      %p274 = scmp.lt.s32.totalorder %s30, 5
      %p275 = pnand %p273, %p274
      %p276 = pneg %p275
      // Predicated region
      $region9: #{tpu_custom_call.1} parent=5 // pred_check
        _
      $region10: #{tpu_custom_call.1} parent=5 // pred_check_branch
        %278 = sbr.rel (%p275) target = $region12
      $region11: #{tpu_custom_call.1} parent=5 // pred_region
        %s279 = ssub.s32 %s30, 1
        // Predicated region
        $region13: #{tpu_custom_call.1} parent=11 // pred_check
          %p280 = pneg %p103
        $region14: #{tpu_custom_call.1} parent=11 // pred_check_branch
          %282 = sbr.rel (%p280) target = $region16
        $region15: #{tpu_custom_call.1} parent=11 // pred_region
          %284 = vsyncadd [#allocation6], 0
          %s285 = sshll.u32 %s2, 4
          %s286 = int_to_ptr.hbm [resolvable:$true] %s285
          %s287 = sshll.u32 [#allocation7], 4
          %s288 = int_to_ptr.vmem [resolvable:$true] %s287
          %293 = dma.hbm_to_vmem [thread:$0]  %s286, 8704, %s288, [#allocation6], 128, 128, 8
        $region16: #{tpu_custom_call.1} parent=11 // pred_fallthru
          _
        // Predicated region
        $region17: #{tpu_custom_call.1} parent=11 // pred_check
          %p294 = pneg %p124
        $region18: #{tpu_custom_call.1} parent=11 // pred_check_branch
          %296 = sbr.rel (%p294) target = $region20
        $region19: #{tpu_custom_call.1} parent=11 // pred_region
          %298 = vsyncadd [#allocation9], 0
          %s299 = sshll.u32 %s3, 4
          %s300 = int_to_ptr.hbm [resolvable:$true] %s299
          %s301 = sshll.u32 [#allocation8], 4
          %s302 = int_to_ptr.vmem [resolvable:$true] %s301
          %307 = dma.hbm_to_vmem [thread:$0]  %s300, 8704, %s302, [#allocation9], 128, 128, 8
        $region20: #{tpu_custom_call.1} parent=11 // pred_fallthru
          _
        // Predicated region
        $region21: #{tpu_custom_call.1} parent=11 // pred_check
          %p308 = pneg %p145
        $region22: #{tpu_custom_call.1} parent=11 // pred_check_branch
          %310 = sbr.rel (%p308) target = $region24
        $region23: #{tpu_custom_call.1} parent=11 // pred_region
          %312 = vsyncadd [#allocation9], 0
          %s314 = sshll.u32 %s4, 4
          %s315 = int_to_ptr.hbm [resolvable:$true] %s314
          %s316 = sshll.u32 [#allocation10], 4
          %s317 = int_to_ptr.vmem [resolvable:$true] %s316
          %319 = dma.hbm_to_vmem [thread:$0]  %s315, 128, %s317, [#allocation9]
        $region24: #{tpu_custom_call.1} parent=11 // pred_fallthru
          _
        // Predicated region
        $region25: #{tpu_custom_call.1} parent=11 // pred_check
          %p320 = pneg %p166
        $region26: #{tpu_custom_call.1} parent=11 // pred_check_branch
          %322 = sbr.rel (%p320) target = $region28
        $region27: #{tpu_custom_call.1} parent=11 // pred_region
          %324 = vsyncadd [#allocation12], 0
          %s325 = sshll.u32 %s5, 4
          %s326 = int_to_ptr.hbm [resolvable:$true] %s325
          %s327 = sshll.u32 [#allocation11], 4
          %s328 = int_to_ptr.vmem [resolvable:$true] %s327
          %333 = dma.hbm_to_vmem [thread:$0]  %s326, 6784, %s328, [#allocation12], 128, 128, 8
        $region28: #{tpu_custom_call.1} parent=11 // pred_fallthru
          _
        // Predicated region
        $region29: #{tpu_custom_call.1} parent=11 // pred_check
          %p334 = pneg %p187
        $region30: #{tpu_custom_call.1} parent=11 // pred_check_branch
          %336 = sbr.rel (%p334) target = $region32
        $region31: #{tpu_custom_call.1} parent=11 // pred_region
          %338 = vsyncadd [#allocation12], 0
          %s339 = sshll.u32 %s6, 4
          %s340 = int_to_ptr.hbm [resolvable:$true] %s339
          %s341 = sshll.u32 [#allocation13], 4
          %s342 = int_to_ptr.vmem [resolvable:$true] %s341
          %347 = dma.hbm_to_vmem [thread:$0]  %s340, 6784, %s342, [#allocation12], 128, 128, 8
        $region32: #{tpu_custom_call.1} parent=11 // pred_fallthru
          _
      $region12: #{tpu_custom_call.1} parent=5 // pred_fallthru
        _
      %p348 = scmp.lt.s32.totalorder %s30, 4
      // Predicated region
      $region33: #{tpu_custom_call.1} parent=5 // pred_check
        %p349 = pneg %p348
      $region34: #{tpu_custom_call.1} parent=5 // pred_check_branch
        %351 = sbr.rel (%p349) target = $region36
      $region35: #{tpu_custom_call.1} parent=5 // pred_region
        // Predicated region
        $region37: #{tpu_custom_call.1} parent=35 // pred_check
          %p352 = pneg %p50
        $region38: #{tpu_custom_call.1} parent=35 // pred_check_branch
          %354 = sbr.rel (%p352) target = $region40
        $region39: #{tpu_custom_call.1} parent=35 // pred_region
          %s355 = sand.u32 %s40, 1
          %s356 = scalar_lea.sflag [#allocation3], %s355
          %s357 = sand.u32 %s40, 1
          %s358 = smul.addr %s357, 8
          %s359 = scalar_lea.vmem [#allocation2], %s358
          %361 = vsyncadd %s356, 0
          %s362 = smul.addr %s30, 8
          %s363 = scalar_lea.hbm %s0, %s362
          %s365 = sshll.u32 %s363, 4
          %s366 = int_to_ptr.hbm [resolvable:$true] %s365
          %s367 = sshll.u32 %s359, 4
          %s368 = int_to_ptr.vmem [resolvable:$true] %s367
          %370 = dma.hbm_to_vmem [thread:$0]  %s366, 128, %s368, %s356
        $region40: #{tpu_custom_call.1} parent=35 // pred_fallthru
          _
        // Predicated region
        $region41: #{tpu_custom_call.1} parent=35 // pred_check
          %p371 = pneg %p76
        $region42: #{tpu_custom_call.1} parent=35 // pred_check_branch
          %373 = sbr.rel (%p371) target = $region44
        $region43: #{tpu_custom_call.1} parent=35 // pred_region
          %s374 = sand.u32 %s30, 1
          %s375 = scalar_lea.sflag [#allocation6], %s374
          %s376 = sand.u32 %s66, 1
          %s377 = smul.addr %s376, 8
          %s378 = scalar_lea.vmem [#allocation5], %s377
          %380 = vsyncadd %s375, 0
          %s381 = smul.addr %s30, 8
          %s382 = scalar_lea.hbm %s1, %s381
          %s384 = sshll.u32 %s382, 4
          %s385 = int_to_ptr.hbm [resolvable:$true] %s384
          %s386 = sshll.u32 %s378, 4
          %s387 = int_to_ptr.vmem [resolvable:$true] %s386
          %389 = dma.hbm_to_vmem [thread:$0]  %s385, 128, %s387, %s375
        $region44: #{tpu_custom_call.1} parent=35 // pred_fallthru
          _
      $region36: #{tpu_custom_call.1} parent=5 // pred_fallthru
        _
      %p390 = scmp.le.s32.totalorder 1, %s30
      %p391 = scmp.lt.s32.totalorder %s30, 5
      %p392 = pnand %p390, %p391
      %p393 = pneg %p392
      // Predicated region
      $region45: #{tpu_custom_call.1} parent=5 // pred_check
        _
      $region46: #{tpu_custom_call.1} parent=5 // pred_check_branch
        %395 = sbr.rel (%p392) target = $region48
      $region47: #{tpu_custom_call.1} parent=5 // pred_region
        %s396 = ssub.s32 %s30, 1
        %s397 = sand.u32 %s43, 1
        %s398 = scalar_lea.sflag [#allocation3], %s397
        %s399 = sand.u32 %s43, 1
        %s400 = smul.addr %s399, 8
        %s401 = scalar_lea.vmem [#allocation2], %s400
        // Predicated region
        $region49: #{tpu_custom_call.1} parent=47 // pred_check
          %p402 = pneg %p56
        $region50: #{tpu_custom_call.1} parent=47 // pred_check_branch
          %404 = sbr.rel (%p402) target = $region52
        $region51: #{tpu_custom_call.1} parent=47 // pred_region
          %406 = dma.done %s398, 128
        $region52: #{tpu_custom_call.1} parent=47 // pred_fallthru
          _
        %s407 = sand.u32 %s35, 1
        %s408 = scalar_lea.sflag [#allocation6], %s407
        %s409 = sand.u32 %s69, 1
        %s410 = smul.addr %s409, 8
        %s411 = scalar_lea.vmem [#allocation5], %s410
        // Predicated region
        $region53: #{tpu_custom_call.1} parent=47 // pred_check
          %p412 = pneg %p82
        $region54: #{tpu_custom_call.1} parent=47 // pred_check_branch
          %414 = sbr.rel (%p412) target = $region56
        $region55: #{tpu_custom_call.1} parent=47 // pred_region
          %416 = dma.done %s408, 128
        $region56: #{tpu_custom_call.1} parent=47 // pred_fallthru
          _
        // Predicated region
        $region57: #{tpu_custom_call.1} parent=47 // pred_check
          %p417 = pneg %p103
        $region58: #{tpu_custom_call.1} parent=47 // pred_check_branch
          %419 = sbr.rel (%p417) target = $region60
        $region59: #{tpu_custom_call.1} parent=47 // pred_region
          %421 = dma.done [#allocation6], 8704
        $region60: #{tpu_custom_call.1} parent=47 // pred_fallthru
          _
        // Predicated region
        $region61: #{tpu_custom_call.1} parent=47 // pred_check
          %p422 = pneg %p124
        $region62: #{tpu_custom_call.1} parent=47 // pred_check_branch
          %424 = sbr.rel (%p422) target = $region64
        $region63: #{tpu_custom_call.1} parent=47 // pred_region
          %426 = dma.done [#allocation9], 8704
        $region64: #{tpu_custom_call.1} parent=47 // pred_fallthru
          _
        // Predicated region
        $region65: #{tpu_custom_call.1} parent=47 // pred_check
          %p427 = pneg %p145
        $region66: #{tpu_custom_call.1} parent=47 // pred_check_branch
          %429 = sbr.rel (%p427) target = $region68
        $region67: #{tpu_custom_call.1} parent=47 // pred_region
          %431 = dma.done [#allocation9], 128
        $region68: #{tpu_custom_call.1} parent=47 // pred_fallthru
          _
        // Predicated region
        $region69: #{tpu_custom_call.1} parent=47 // pred_check
          %p432 = pneg %p166
        $region70: #{tpu_custom_call.1} parent=47 // pred_check_branch
          %434 = sbr.rel (%p432) target = $region72
        $region71: #{tpu_custom_call.1} parent=47 // pred_region
          %436 = dma.done [#allocation12], 6784
        $region72: #{tpu_custom_call.1} parent=47 // pred_fallthru
          _
        // Predicated region
        $region73: #{tpu_custom_call.1} parent=47 // pred_check
          %p437 = pneg %p187
        $region74: #{tpu_custom_call.1} parent=47 // pred_check_branch
          %439 = sbr.rel (%p437) target = $region76
        $region75: #{tpu_custom_call.1} parent=47 // pred_region
          %441 = dma.done [#allocation12], 6784
        $region76: #{tpu_custom_call.1} parent=47 // pred_fallthru
          _
        %s442 = sand.u32 %s43, 1
        %s443 = scalar_lea.sflag [#allocation3], %s442
        %s444 = sand.u32 %s43, 1
        %s445 = smul.addr %s444, 8
        %s446 = scalar_lea.vmem [#allocation2], %s445
        %p447 = pneg %p56
        %p448 = pneg %p53
        %s449 = sand.u32 %s35, 1
        %s450 = scalar_lea.sflag [#allocation6], %s449
        %s451 = sand.u32 %s69, 1
        %s452 = smul.addr %s451, 8
        %s453 = scalar_lea.vmem [#allocation5], %s452
        %p454 = pneg %p82
        %p455 = pneg %p79
        %p456 = pneg %p103
        %p457 = pneg %p100
        %p458 = pneg %p124
        %p459 = pneg %p121
        %p460 = pneg %p145
        %p461 = pneg %p142
        %p462 = pneg %p166
        %p463 = pneg %p163
        %p464 = pneg %p187
        %p465 = pneg %p184
        %p466 = pneg %p213
        %p467 = pneg %p210
        %s468 = sand.u32 %s200, 1
        %s469 = scalar_lea.sflag [#allocation4], %s468
        %s470 = sand.u32 %s200, 1
        %s471 = smul.addr %s470, 8
        %s472 = scalar_lea.vmem [#allocation14], %s471
        %p473 = pneg %p239
        %p474 = pneg %p236
        %s475 = sand.u32 %s35, 1
        %s476 = scalar_lea.sflag [#allocation16], %s475
        %s477 = sand.u32 %s226, 1
        %s478 = smul.addr %s477, 8
        %s479 = scalar_lea.vmem [#allocation15], %s478
        %p480 = pneg %p265
        %p481 = pneg %p262
        %s482 = sand.u32 %s35, 1
        %s483 = scalar_lea.sflag [#allocation16], %s482
        %s484 = sand.u32 %s252, 1
        %s485 = smul.addr %s484, 8
        %s486 = scalar_lea.vmem [#allocation17], %s485
        %v487 = vld [vmem:[%s401] sm:$0xff]
        %v488 = vld [vmem:[%s411] sm:$0xff]
        %v489 = vld [vmem:[#allocation7] sm:$0xff]
        %v490 = vld [vmem:[#allocation7 + $0x8] sm:$0xff]
        %v491 = vld [vmem:[#allocation7 + $0x10] sm:$0xff]
        %v492 = vld [vmem:[#allocation7 + $0x18] sm:$0xff]
        %v493 = vld [vmem:[#allocation7 + $0x20] sm:$0xff]
        %v494 = vld [vmem:[#allocation7 + $0x28] sm:$0xff]
        %v495 = vld [vmem:[#allocation7 + $0x30] sm:$0xff]
        %v496 = vld [vmem:[#allocation7 + $0x38] sm:$0xff]
        %v497 = vld [vmem:[#allocation7 + $0x40] sm:$0xff]
        %v498 = vld [vmem:[#allocation7 + $0x48] sm:$0xff]
        %v499 = vld [vmem:[#allocation7 + $0x50] sm:$0xff]
        %v500 = vld [vmem:[#allocation7 + $0x58] sm:$0xff]
        %v501 = vld [vmem:[#allocation7 + $0x60] sm:$0xff]
        %v502 = vld [vmem:[#allocation7 + $0x68] sm:$0xff]
        %v503 = vld [vmem:[#allocation7 + $0x70] sm:$0xff]
        %v504 = vld [vmem:[#allocation7 + $0x78] sm:$0xff]
        %v505 = vld [vmem:[#allocation7 + $0x80] sm:$0x7]
        %v506 = vperm.slane %v505, 0
        %507 = vmatpush.msra.mxu0 %v504
        %508 = vmatpush.msra.mxu0 %v503
        %509 = vmatpush.msra.mxu0 %v502
        %510 = vmatpush.msra.mxu0 %v501
        %511 = vmatpush.msra.mxu0 %v500
        %512 = vmatpush.msra.mxu0 %v499
        %513 = vmatpush.msra.mxu0 %v498
        %514 = vmatpush.msra.mxu0 %v497
        %515 = vmatpush.msra.mxu0 %v496
        %516 = vmatpush.msra.mxu0 %v495
        %517 = vmatpush.msra.mxu0 %v494
        %518 = vmatpush.msra.mxu0 %v493
        %519 = vmatpush.msra.mxu0 %v492
        %520 = vmatpush.msra.mxu0 %v491
        %521 = vmatpush.msra.mxu0 %v490
        %522 = vmatpush.msra.mxu0 %v489
        %523 = vmatmul.f32.gmra.mxu0 %v487
        %v524 = vpop.f32.mrf.mxu0
        %v525 = vadd.f32 %v506, %v524
        %526 = vdwg.mxu0
        %v527 = vrot.slane %v525, 4
        %v528 = vadd.f32 %v525, %v527
        %v529 = vrot.slane %v528, 2
        %v530 = vadd.f32 %v528, %v529
        %v531 = vrot.slane %v530, 1
        %v532 = vadd.f32 %v530, %v531
        %v533 = vrcp.pop 8.0
        %v534 = vmul.f32 8.0, %v533
        %v535 = vsub.f32 1.0, %v534
        %v536 = vmul.f32 %v533, %v535
        %v537 = vadd.f32 %v533, %v536
        %vm538 = vweird.f32 %v533
        %v539 = vsel %vm538, %v533, %v537
        %v540 = vmul.f32 %v532, %v539
        %v541 = vsub.f32 %v525, %v540
        %v542 = vmul.f32 %v541, %v541
        %v543 = vrot.slane %v542, 4
        %v544 = vadd.f32 %v542, %v543
        %v545 = vrot.slane %v544, 2
        %v546 = vadd.f32 %v544, %v545
        %v547 = vrot.slane %v546, 1
        %v548 = vadd.f32 %v546, %v547
        %v549 = vmul.f32 %v548, %v539
        %v550 = vadd.f32 %v549, 1e-05
        %v551 = vrsqrt.pop %v550
        %v552 = vmul.f32 %v551, %v550
        %v553 = vmul.f32 %v552, %v551
        %v554 = vmul.f32 0.5, %v553
        %v555 = vsub.f32 1.5, %v554
        %v556 = vmul.f32 %v551, %v555
        %vm557 = vweird.f32 %v550
        %vm558 = vweird.f32 %v551
        %vm559 = vmor %vm557, %vm558
        %v560 = vsel %vm559, %v551, %v556
        %v561 = vmul.f32 %v541, %v560
        %v562 = vperm.slane %v505, 1
        %v563 = vmul.f32 %v561, %v562
        %v564 = vperm.slane %v505, 2
        %v565 = vadd.f32 %v563, %v564
        %vm566 = vcmp.ge.f32.partialorder %v565, 0.0
        %v567 = vmul.f32 %v565, 0.2
        %v568 = vsel %vm566, %v565, %v567
        %v569 = vld [vmem:[#allocation7 + $0x88] sm:$0xff]
        %v570 = vld [vmem:[#allocation7 + $0x90] sm:$0xff]
        %v571 = vld [vmem:[#allocation7 + $0x98] sm:$0xff]
        %v572 = vld [vmem:[#allocation7 + $0xa0] sm:$0xff]
        %v573 = vld [vmem:[#allocation7 + $0xa8] sm:$0xff]
        %v574 = vld [vmem:[#allocation7 + $0xb0] sm:$0xff]
        %v575 = vld [vmem:[#allocation7 + $0xb8] sm:$0xff]
        %v576 = vld [vmem:[#allocation7 + $0xc0] sm:$0xff]
        %v577 = vld [vmem:[#allocation7 + $0xc8] sm:$0xff]
        %v578 = vld [vmem:[#allocation7 + $0xd0] sm:$0xff]
        %v579 = vld [vmem:[#allocation7 + $0xd8] sm:$0xff]
        %v580 = vld [vmem:[#allocation7 + $0xe0] sm:$0xff]
        %v581 = vld [vmem:[#allocation7 + $0xe8] sm:$0xff]
        %v582 = vld [vmem:[#allocation7 + $0xf0] sm:$0xff]
        %v583 = vld [vmem:[#allocation7 + $0xf8] sm:$0xff]
        %v584 = vld [vmem:[#allocation7 + $0x100] sm:$0xff]
        %v585 = vld [vmem:[#allocation7 + $0x108] sm:$0x7]
        %v586 = vperm.slane %v585, 0
        %587 = vmatpush.msra.mxu0 %v584
        %588 = vmatpush.msra.mxu0 %v583
        %589 = vmatpush.msra.mxu0 %v582
        %590 = vmatpush.msra.mxu0 %v581
        %591 = vmatpush.msra.mxu0 %v580
        %592 = vmatpush.msra.mxu0 %v579
        %593 = vmatpush.msra.mxu0 %v578
        %594 = vmatpush.msra.mxu0 %v577
        %595 = vmatpush.msra.mxu0 %v576
        %596 = vmatpush.msra.mxu0 %v575
        %597 = vmatpush.msra.mxu0 %v574
        %598 = vmatpush.msra.mxu0 %v573
        %599 = vmatpush.msra.mxu0 %v572
        %600 = vmatpush.msra.mxu0 %v571
        %601 = vmatpush.msra.mxu0 %v570
        %602 = vmatpush.msra.mxu0 %v569
        %603 = vmatmul.f32.gmra.mxu0 %v568
        %v604 = vpop.f32.mrf.mxu0
        %v605 = vadd.f32 %v586, %v604
        %606 = vdwg.mxu0
        %v607 = vrot.slane %v605, 4
        %v608 = vadd.f32 %v605, %v607
        %v609 = vrot.slane %v608, 2
        %v610 = vadd.f32 %v608, %v609
        %v611 = vrot.slane %v610, 1
        %v612 = vadd.f32 %v610, %v611
        %v613 = vmul.f32 %v612, %v539
        %v614 = vsub.f32 %v605, %v613
        %v615 = vmul.f32 %v614, %v614
        %v616 = vrot.slane %v615, 4
        %v617 = vadd.f32 %v615, %v616
        %v618 = vrot.slane %v617, 2
        %v619 = vadd.f32 %v617, %v618
        %v620 = vrot.slane %v619, 1
        %v621 = vadd.f32 %v619, %v620
        %v622 = vmul.f32 %v621, %v539
        %v623 = vadd.f32 %v622, 1e-05
        %v624 = vrsqrt.pop %v623
        %v625 = vmul.f32 %v624, %v623
        %v626 = vmul.f32 %v625, %v624
        %v627 = vmul.f32 0.5, %v626
        %v628 = vsub.f32 1.5, %v627
        %v629 = vmul.f32 %v624, %v628
        %vm630 = vweird.f32 %v623
        %vm631 = vweird.f32 %v624
        %vm632 = vmor %vm630, %vm631
        %v633 = vsel %vm632, %v624, %v629
        %v634 = vmul.f32 %v614, %v633
        %v635 = vperm.slane %v585, 1
        %v636 = vmul.f32 %v634, %v635
        %v637 = vperm.slane %v585, 2
        %v638 = vadd.f32 %v636, %v637
        %vm639 = vcmp.ge.f32.partialorder %v638, 0.0
        %v640 = vmul.f32 %v638, 0.2
        %v641 = vsel %vm639, %v638, %v640
        %v642 = vld [vmem:[#allocation7 + $0x110] sm:$0xff]
        %v643 = vld [vmem:[#allocation7 + $0x118] sm:$0xff]
        %v644 = vld [vmem:[#allocation7 + $0x120] sm:$0xff]
        %v645 = vld [vmem:[#allocation7 + $0x128] sm:$0xff]
        %v646 = vld [vmem:[#allocation7 + $0x130] sm:$0xff]
        %v647 = vld [vmem:[#allocation7 + $0x138] sm:$0xff]
        %v648 = vld [vmem:[#allocation7 + $0x140] sm:$0xff]
        %v649 = vld [vmem:[#allocation7 + $0x148] sm:$0xff]
        %v650 = vld [vmem:[#allocation7 + $0x150] sm:$0xff]
        %v651 = vld [vmem:[#allocation7 + $0x158] sm:$0xff]
        %v652 = vld [vmem:[#allocation7 + $0x160] sm:$0xff]
        %v653 = vld [vmem:[#allocation7 + $0x168] sm:$0xff]
        %v654 = vld [vmem:[#allocation7 + $0x170] sm:$0xff]
        %v655 = vld [vmem:[#allocation7 + $0x178] sm:$0xff]
        %v656 = vld [vmem:[#allocation7 + $0x180] sm:$0xff]
        %v657 = vld [vmem:[#allocation7 + $0x188] sm:$0xff]
        %v658 = vld [vmem:[#allocation7 + $0x190] sm:$0x7]
        %v659 = vperm.slane %v658, 0
        %660 = vmatpush.msra.mxu0 %v657
        %661 = vmatpush.msra.mxu0 %v656
        %662 = vmatpush.msra.mxu0 %v655
        %663 = vmatpush.msra.mxu0 %v654
        %664 = vmatpush.msra.mxu0 %v653
        %665 = vmatpush.msra.mxu0 %v652
        %666 = vmatpush.msra.mxu0 %v651
        %667 = vmatpush.msra.mxu0 %v650
        %668 = vmatpush.msra.mxu0 %v649
        %669 = vmatpush.msra.mxu0 %v648
        %670 = vmatpush.msra.mxu0 %v647
        %671 = vmatpush.msra.mxu0 %v646
        %672 = vmatpush.msra.mxu0 %v645
        %673 = vmatpush.msra.mxu0 %v644
        %674 = vmatpush.msra.mxu0 %v643
        %675 = vmatpush.msra.mxu0 %v642
        %676 = vmatmul.f32.gmra.mxu0 %v641
        %v677 = vpop.f32.mrf.mxu0
        %v678 = vadd.f32 %v659, %v677
        %679 = vdwg.mxu0
        %v680 = vrot.slane %v678, 4
        %v681 = vadd.f32 %v678, %v680
        %v682 = vrot.slane %v681, 2
        %v683 = vadd.f32 %v681, %v682
        %v684 = vrot.slane %v683, 1
        %v685 = vadd.f32 %v683, %v684
        %v686 = vmul.f32 %v685, %v539
        %v687 = vsub.f32 %v678, %v686
        %v688 = vmul.f32 %v687, %v687
        %v689 = vrot.slane %v688, 4
        %v690 = vadd.f32 %v688, %v689
        %v691 = vrot.slane %v690, 2
        %v692 = vadd.f32 %v690, %v691
        %v693 = vrot.slane %v692, 1
        %v694 = vadd.f32 %v692, %v693
        %v695 = vmul.f32 %v694, %v539
        %v696 = vadd.f32 %v695, 1e-05
        %v697 = vrsqrt.pop %v696
        %v698 = vmul.f32 %v697, %v696
        %v699 = vmul.f32 %v698, %v697
        %v700 = vmul.f32 0.5, %v699
        %v701 = vsub.f32 1.5, %v700
        %v702 = vmul.f32 %v697, %v701
        %vm703 = vweird.f32 %v696
        %vm704 = vweird.f32 %v697
        %vm705 = vmor %vm703, %vm704
        %v706 = vsel %vm705, %v697, %v702
        %v707 = vmul.f32 %v687, %v706
        %v708 = vperm.slane %v658, 1
        %v709 = vmul.f32 %v707, %v708
        %v710 = vperm.slane %v658, 2
        %v711 = vadd.f32 %v709, %v710
        %vm712 = vcmp.ge.f32.partialorder %v711, 0.0
        %v713 = vmul.f32 %v711, 0.2
        %v714 = vsel %vm712, %v711, %v713
        %v715 = vld [vmem:[#allocation7 + $0x198] sm:$0xff]
        %v716 = vld [vmem:[#allocation7 + $0x1a0] sm:$0xff]
        %v717 = vld [vmem:[#allocation7 + $0x1a8] sm:$0xff]
        %v718 = vld [vmem:[#allocation7 + $0x1b0] sm:$0xff]
        %v719 = vld [vmem:[#allocation7 + $0x1b8] sm:$0xff]
        %v720 = vld [vmem:[#allocation7 + $0x1c0] sm:$0xff]
        %v721 = vld [vmem:[#allocation7 + $0x1c8] sm:$0xff]
        %v722 = vld [vmem:[#allocation7 + $0x1d0] sm:$0xff]
        %v723 = vld [vmem:[#allocation7 + $0x1d8] sm:$0xff]
        %v724 = vld [vmem:[#allocation7 + $0x1e0] sm:$0xff]
        %v725 = vld [vmem:[#allocation7 + $0x1e8] sm:$0xff]
        %v726 = vld [vmem:[#allocation7 + $0x1f0] sm:$0xff]
        %v727 = vld [vmem:[#allocation7 + $0x1f8] sm:$0xff]
        %v728 = vld [vmem:[#allocation7 + $0x200] sm:$0xff]
        %v729 = vld [vmem:[#allocation7 + $0x208] sm:$0xff]
        %v730 = vld [vmem:[#allocation7 + $0x210] sm:$0xff]
        %v731 = vld [vmem:[#allocation7 + $0x218] sm:$0x1]
        %v732 = vperm.slane %v731, 0
        %733 = vmatpush.msra.mxu0 %v730
        %734 = vmatpush.msra.mxu0 %v729
        %735 = vmatpush.msra.mxu0 %v728
        %736 = vmatpush.msra.mxu0 %v727
        %737 = vmatpush.msra.mxu0 %v726
        %738 = vmatpush.msra.mxu0 %v725
        %739 = vmatpush.msra.mxu0 %v724
        %740 = vmatpush.msra.mxu0 %v723
        %741 = vmatpush.msra.mxu0 %v722
        %742 = vmatpush.msra.mxu0 %v721
        %743 = vmatpush.msra.mxu0 %v720
        %744 = vmatpush.msra.mxu0 %v719
        %745 = vmatpush.msra.mxu0 %v718
        %746 = vmatpush.msra.mxu0 %v717
        %747 = vmatpush.msra.mxu0 %v716
        %748 = vmatpush.msra.mxu0 %v715
        %749 = vmatmul.f32.gmra.mxu0 %v714
        %v750 = vpop.f32.mrf.mxu0
        %v751 = vadd.f32 %v732, %v750
        %752 = vdwg.mxu0
        %v753 = vld [vmem:[#allocation8] sm:$0xff]
        %v754 = vld [vmem:[#allocation8 + $0x8] sm:$0xff]
        %v755 = vld [vmem:[#allocation8 + $0x10] sm:$0xff]
        %v756 = vld [vmem:[#allocation8 + $0x18] sm:$0xff]
        %v757 = vld [vmem:[#allocation8 + $0x20] sm:$0xff]
        %v758 = vld [vmem:[#allocation8 + $0x28] sm:$0xff]
        %v759 = vld [vmem:[#allocation8 + $0x30] sm:$0xff]
        %v760 = vld [vmem:[#allocation8 + $0x38] sm:$0xff]
        %v761 = vld [vmem:[#allocation8 + $0x40] sm:$0xff]
        %v762 = vld [vmem:[#allocation8 + $0x48] sm:$0xff]
        %v763 = vld [vmem:[#allocation8 + $0x50] sm:$0xff]
        %v764 = vld [vmem:[#allocation8 + $0x58] sm:$0xff]
        %v765 = vld [vmem:[#allocation8 + $0x60] sm:$0xff]
        %v766 = vld [vmem:[#allocation8 + $0x68] sm:$0xff]
        %v767 = vld [vmem:[#allocation8 + $0x70] sm:$0xff]
        %v768 = vld [vmem:[#allocation8 + $0x78] sm:$0xff]
        %v769 = vld [vmem:[#allocation8 + $0x80] sm:$0x7]
        %v770 = vperm.slane %v769, 0
        %771 = vmatpush.msra.mxu0 %v768
        %772 = vmatpush.msra.mxu0 %v767
        %773 = vmatpush.msra.mxu0 %v766
        %774 = vmatpush.msra.mxu0 %v765
        %775 = vmatpush.msra.mxu0 %v764
        %776 = vmatpush.msra.mxu0 %v763
        %777 = vmatpush.msra.mxu0 %v762
        %778 = vmatpush.msra.mxu0 %v761
        %779 = vmatpush.msra.mxu0 %v760
        %780 = vmatpush.msra.mxu0 %v759
        %781 = vmatpush.msra.mxu0 %v758
        %782 = vmatpush.msra.mxu0 %v757
        %783 = vmatpush.msra.mxu0 %v756
        %784 = vmatpush.msra.mxu0 %v755
        %785 = vmatpush.msra.mxu0 %v754
        %786 = vmatpush.msra.mxu0 %v753
        %787 = vmatmul.f32.gmra.mxu0 %v488
        %v788 = vpop.f32.mrf.mxu0
        %v789 = vadd.f32 %v770, %v788
        %790 = vdwg.mxu0
        %v791 = vrot.slane %v789, 4
        %v792 = vadd.f32 %v789, %v791
        %v793 = vrot.slane %v792, 2
        %v794 = vadd.f32 %v792, %v793
        %v795 = vrot.slane %v794, 1
        %v796 = vadd.f32 %v794, %v795
        %v797 = vmul.f32 %v796, %v539
        %v798 = vsub.f32 %v789, %v797
        %v799 = vmul.f32 %v798, %v798
        %v800 = vrot.slane %v799, 4
        %v801 = vadd.f32 %v799, %v800
        %v802 = vrot.slane %v801, 2
        %v803 = vadd.f32 %v801, %v802
        %v804 = vrot.slane %v803, 1
        %v805 = vadd.f32 %v803, %v804
        %v806 = vmul.f32 %v805, %v539
        %v807 = vadd.f32 %v806, 1e-05
        %v808 = vrsqrt.pop %v807
        %v809 = vmul.f32 %v808, %v807
        %v810 = vmul.f32 %v809, %v808
        %v811 = vmul.f32 0.5, %v810
        %v812 = vsub.f32 1.5, %v811
        %v813 = vmul.f32 %v808, %v812
        %vm814 = vweird.f32 %v807
        %vm815 = vweird.f32 %v808
        %vm816 = vmor %vm814, %vm815
        %v817 = vsel %vm816, %v808, %v813
        %v818 = vmul.f32 %v798, %v817
        %v819 = vperm.slane %v769, 1
        %v820 = vmul.f32 %v818, %v819
        %v821 = vperm.slane %v769, 2
        %v822 = vadd.f32 %v820, %v821
        %vm823 = vcmp.ge.f32.partialorder %v822, 0.0
        %v824 = vmul.f32 %v822, 0.2
        %v825 = vsel %vm823, %v822, %v824
        %v826 = vld [vmem:[#allocation8 + $0x88] sm:$0xff]
        %v827 = vld [vmem:[#allocation8 + $0x90] sm:$0xff]
        %v828 = vld [vmem:[#allocation8 + $0x98] sm:$0xff]
        %v829 = vld [vmem:[#allocation8 + $0xa0] sm:$0xff]
        %v830 = vld [vmem:[#allocation8 + $0xa8] sm:$0xff]
        %v831 = vld [vmem:[#allocation8 + $0xb0] sm:$0xff]
        %v832 = vld [vmem:[#allocation8 + $0xb8] sm:$0xff]
        %v833 = vld [vmem:[#allocation8 + $0xc0] sm:$0xff]
        %v834 = vld [vmem:[#allocation8 + $0xc8] sm:$0xff]
        %v835 = vld [vmem:[#allocation8 + $0xd0] sm:$0xff]
        %v836 = vld [vmem:[#allocation8 + $0xd8] sm:$0xff]
        %v837 = vld [vmem:[#allocation8 + $0xe0] sm:$0xff]
        %v838 = vld [vmem:[#allocation8 + $0xe8] sm:$0xff]
        %v839 = vld [vmem:[#allocation8 + $0xf0] sm:$0xff]
        %v840 = vld [vmem:[#allocation8 + $0xf8] sm:$0xff]
        %v841 = vld [vmem:[#allocation8 + $0x100] sm:$0xff]
        %v842 = vld [vmem:[#allocation8 + $0x108] sm:$0x7]
        %v843 = vperm.slane %v842, 0
        %844 = vmatpush.msra.mxu0 %v841
        %845 = vmatpush.msra.mxu0 %v840
        %846 = vmatpush.msra.mxu0 %v839
        %847 = vmatpush.msra.mxu0 %v838
        %848 = vmatpush.msra.mxu0 %v837
        %849 = vmatpush.msra.mxu0 %v836
        %850 = vmatpush.msra.mxu0 %v835
        %851 = vmatpush.msra.mxu0 %v834
        %852 = vmatpush.msra.mxu0 %v833
        %853 = vmatpush.msra.mxu0 %v832
        %854 = vmatpush.msra.mxu0 %v831
        %855 = vmatpush.msra.mxu0 %v830
        %856 = vmatpush.msra.mxu0 %v829
        %857 = vmatpush.msra.mxu0 %v828
        %858 = vmatpush.msra.mxu0 %v827
        %859 = vmatpush.msra.mxu0 %v826
        %860 = vmatmul.f32.gmra.mxu0 %v825
        %v861 = vpop.f32.mrf.mxu0
        %v862 = vadd.f32 %v843, %v861
        %863 = vdwg.mxu0
        %v864 = vrot.slane %v862, 4
        %v865 = vadd.f32 %v862, %v864
        %v866 = vrot.slane %v865, 2
        %v867 = vadd.f32 %v865, %v866
        %v868 = vrot.slane %v867, 1
        %v869 = vadd.f32 %v867, %v868
        %v870 = vmul.f32 %v869, %v539
        %v871 = vsub.f32 %v862, %v870
        %v872 = vmul.f32 %v871, %v871
        %v873 = vrot.slane %v872, 4
        %v874 = vadd.f32 %v872, %v873
        %v875 = vrot.slane %v874, 2
        %v876 = vadd.f32 %v874, %v875
        %v877 = vrot.slane %v876, 1
        %v878 = vadd.f32 %v876, %v877
        %v879 = vmul.f32 %v878, %v539
        %v880 = vadd.f32 %v879, 1e-05
        %v881 = vrsqrt.pop %v880
        %v882 = vmul.f32 %v881, %v880
        %v883 = vmul.f32 %v882, %v881
        %v884 = vmul.f32 0.5, %v883
        %v885 = vsub.f32 1.5, %v884
        %v886 = vmul.f32 %v881, %v885
        %vm887 = vweird.f32 %v880
        %vm888 = vweird.f32 %v881
        %vm889 = vmor %vm887, %vm888
        %v890 = vsel %vm889, %v881, %v886
        %v891 = vmul.f32 %v871, %v890
        %v892 = vperm.slane %v842, 1
        %v893 = vmul.f32 %v891, %v892
        %v894 = vperm.slane %v842, 2
        %v895 = vadd.f32 %v893, %v894
        %vm896 = vcmp.ge.f32.partialorder %v895, 0.0
        %v897 = vmul.f32 %v895, 0.2
        %v898 = vsel %vm896, %v895, %v897
        %v899 = vld [vmem:[#allocation8 + $0x110] sm:$0xff]
        %v900 = vld [vmem:[#allocation8 + $0x118] sm:$0xff]
        %v901 = vld [vmem:[#allocation8 + $0x120] sm:$0xff]
        %v902 = vld [vmem:[#allocation8 + $0x128] sm:$0xff]
        %v903 = vld [vmem:[#allocation8 + $0x130] sm:$0xff]
        %v904 = vld [vmem:[#allocation8 + $0x138] sm:$0xff]
        %v905 = vld [vmem:[#allocation8 + $0x140] sm:$0xff]
        %v906 = vld [vmem:[#allocation8 + $0x148] sm:$0xff]
        %v907 = vld [vmem:[#allocation8 + $0x150] sm:$0xff]
        %v908 = vld [vmem:[#allocation8 + $0x158] sm:$0xff]
        %v909 = vld [vmem:[#allocation8 + $0x160] sm:$0xff]
        %v910 = vld [vmem:[#allocation8 + $0x168] sm:$0xff]
        %v911 = vld [vmem:[#allocation8 + $0x170] sm:$0xff]
        %v912 = vld [vmem:[#allocation8 + $0x178] sm:$0xff]
        %v913 = vld [vmem:[#allocation8 + $0x180] sm:$0xff]
        %v914 = vld [vmem:[#allocation8 + $0x188] sm:$0xff]
        %v915 = vld [vmem:[#allocation8 + $0x190] sm:$0x7]
        %v916 = vperm.slane %v915, 0
        %917 = vmatpush.msra.mxu0 %v914
        %918 = vmatpush.msra.mxu0 %v913
        %919 = vmatpush.msra.mxu0 %v912
        %920 = vmatpush.msra.mxu0 %v911
        %921 = vmatpush.msra.mxu0 %v910
        %922 = vmatpush.msra.mxu0 %v909
        %923 = vmatpush.msra.mxu0 %v908
        %924 = vmatpush.msra.mxu0 %v907
        %925 = vmatpush.msra.mxu0 %v906
        %926 = vmatpush.msra.mxu0 %v905
        %927 = vmatpush.msra.mxu0 %v904
        %928 = vmatpush.msra.mxu0 %v903
        %929 = vmatpush.msra.mxu0 %v902
        %930 = vmatpush.msra.mxu0 %v901
        %931 = vmatpush.msra.mxu0 %v900
        %932 = vmatpush.msra.mxu0 %v899
        %933 = vmatmul.f32.gmra.mxu0 %v898
        %v934 = vpop.f32.mrf.mxu0
        %v935 = vadd.f32 %v916, %v934
        %936 = vdwg.mxu0
        %v937 = vrot.slane %v935, 4
        %v938 = vadd.f32 %v935, %v937
        %v939 = vrot.slane %v938, 2
        %v940 = vadd.f32 %v938, %v939
        %v941 = vrot.slane %v940, 1
        %v942 = vadd.f32 %v940, %v941
        %v943 = vmul.f32 %v942, %v539
        %v944 = vsub.f32 %v935, %v943
        %v945 = vmul.f32 %v944, %v944
        %v946 = vrot.slane %v945, 4
        %v947 = vadd.f32 %v945, %v946
        %v948 = vrot.slane %v947, 2
        %v949 = vadd.f32 %v947, %v948
        %v950 = vrot.slane %v949, 1
        %v951 = vadd.f32 %v949, %v950
        %v952 = vmul.f32 %v951, %v539
        %v953 = vadd.f32 %v952, 1e-05
        %v954 = vrsqrt.pop %v953
        %v955 = vmul.f32 %v954, %v953
        %v956 = vmul.f32 %v955, %v954
        %v957 = vmul.f32 0.5, %v956
        %v958 = vsub.f32 1.5, %v957
        %v959 = vmul.f32 %v954, %v958
        %vm960 = vweird.f32 %v953
        %vm961 = vweird.f32 %v954
        %vm962 = vmor %vm960, %vm961
        %v963 = vsel %vm962, %v954, %v959
        %v964 = vmul.f32 %v944, %v963
        %v965 = vperm.slane %v915, 1
        %v966 = vmul.f32 %v964, %v965
        %v967 = vperm.slane %v915, 2
        %v968 = vadd.f32 %v966, %v967
        %vm969 = vcmp.ge.f32.partialorder %v968, 0.0
        %v970 = vmul.f32 %v968, 0.2
        %v971 = vsel %vm969, %v968, %v970
        %v972 = vld [vmem:[#allocation8 + $0x198] sm:$0xff]
        %v973 = vld [vmem:[#allocation8 + $0x1a0] sm:$0xff]
        %v974 = vld [vmem:[#allocation8 + $0x1a8] sm:$0xff]
        %v975 = vld [vmem:[#allocation8 + $0x1b0] sm:$0xff]
        %v976 = vld [vmem:[#allocation8 + $0x1b8] sm:$0xff]
        %v977 = vld [vmem:[#allocation8 + $0x1c0] sm:$0xff]
        %v978 = vld [vmem:[#allocation8 + $0x1c8] sm:$0xff]
        %v979 = vld [vmem:[#allocation8 + $0x1d0] sm:$0xff]
        %v980 = vld [vmem:[#allocation8 + $0x1d8] sm:$0xff]
        %v981 = vld [vmem:[#allocation8 + $0x1e0] sm:$0xff]
        %v982 = vld [vmem:[#allocation8 + $0x1e8] sm:$0xff]
        %v983 = vld [vmem:[#allocation8 + $0x1f0] sm:$0xff]
        %v984 = vld [vmem:[#allocation8 + $0x1f8] sm:$0xff]
        %v985 = vld [vmem:[#allocation8 + $0x200] sm:$0xff]
        %v986 = vld [vmem:[#allocation8 + $0x208] sm:$0xff]
        %v987 = vld [vmem:[#allocation8 + $0x210] sm:$0xff]
        %v988 = vld [vmem:[#allocation8 + $0x218] sm:$0x1]
        %v989 = vperm.slane %v988, 0
        %990 = vmatpush.msra.mxu0 %v987
        %991 = vmatpush.msra.mxu0 %v986
        %992 = vmatpush.msra.mxu0 %v985
        %993 = vmatpush.msra.mxu0 %v984
        %994 = vmatpush.msra.mxu0 %v983
        %995 = vmatpush.msra.mxu0 %v982
        %996 = vmatpush.msra.mxu0 %v981
        %997 = vmatpush.msra.mxu0 %v980
        %998 = vmatpush.msra.mxu0 %v979
        %999 = vmatpush.msra.mxu0 %v978
        %1000 = vmatpush.msra.mxu0 %v977
        %1001 = vmatpush.msra.mxu0 %v976
        %1002 = vmatpush.msra.mxu0 %v975
        %1003 = vmatpush.msra.mxu0 %v974
        %1004 = vmatpush.msra.mxu0 %v973
        %1005 = vmatpush.msra.mxu0 %v972
        %1006 = vmatmul.f32.gmra.mxu0 %v971
        %v1007 = vpop.f32.mrf.mxu0
        %v1008 = vadd.f32 %v989, %v1007
        %1009 = vdwg.mxu0
        %v1010 = vld [vmem:[#allocation10] sm:$0xff]
        %1012 = vset.pattern.permute.xlu0 0
        %1013 = vperm.xlu0 %1012, %v751
        %v1014 = vpop.permute.xlu0 %1013
        %v1016 = vperm.slane %v1010, 0
        %v1017 = vmul.f32 %v1014, %v1016
        %v1018 = vperm.slane %v1010, 4
        %v1019 = vadd.f32 %v1018, %v1017
        %1020 = vset.pattern.permute.xlu0 1
        %1021 = vperm.xlu0 %1020, %v751
        %v1022 = vpop.permute.xlu0 %1021
        %v1024 = vperm.slane %v1010, 1
        %v1025 = vmul.f32 %v1022, %v1024
        %v1026 = vadd.f32 %v1019, %v1025
        %1028 = vset.pattern.permute.xlu0 0
        %1029 = vperm.xlu0 %1028, %v1008
        %v1030 = vpop.permute.xlu0 %1029
        %v1032 = vperm.slane %v1010, 2
        %v1033 = vmul.f32 %v1030, %v1032
        %v1034 = vadd.f32 %v1026, %v1033
        %1035 = vset.pattern.permute.xlu0 1
        %1036 = vperm.xlu0 %1035, %v1008
        %v1037 = vpop.permute.xlu0 %1036
        %v1039 = vperm.slane %v1010, 3
        %v1040 = vmul.f32 %v1037, %v1039
        %v1041 = vadd.f32 %v1034, %v1040
        %1042 = vst [vmem:[%s486] sm:$0xff] %v1041
        %v1043 = vld [vmem:[#allocation11] sm:$0x3]
        %1045 = vset.pattern.permute.xlu0 0
        %1046 = vperm.xlu0 %1045, %v1041
        %v1047 = vpop.permute.xlu0 %1046
        %v1049 = vperm.slane %v1043, 0
        %v1050 = vmul.f32 %v1047, %v1049
        %1051 = vset.pattern.permute.xlu0 1
        %1052 = vperm.xlu0 %1051, %v1041
        %v1053 = vpop.permute.xlu0 %1052
        %v1055 = vperm.slane %v1043, 1
        %v1056 = vmul.f32 %v1053, %v1055
        %v1057 = vadd.f32 %v1050, %v1056
        %v1058 = vld [vmem:[#allocation11 + $0x8] sm:$0x7]
        %v1059 = vperm.slane %v1058, 0
        %v1060 = vadd.f32 %v1057, %v1059
        %v1061 = vrot.slane %v1060, 4
        %v1062 = vadd.f32 %v1060, %v1061
        %v1063 = vrot.slane %v1062, 2
        %v1064 = vadd.f32 %v1062, %v1063
        %v1065 = vrot.slane %v1064, 1
        %v1066 = vadd.f32 %v1064, %v1065
        %v1067 = vmul.f32 %v1066, %v539
        %v1068 = vsub.f32 %v1060, %v1067
        %v1069 = vmul.f32 %v1068, %v1068
        %v1070 = vrot.slane %v1069, 4
        %v1071 = vadd.f32 %v1069, %v1070
        %v1072 = vrot.slane %v1071, 2
        %v1073 = vadd.f32 %v1071, %v1072
        %v1074 = vrot.slane %v1073, 1
        %v1075 = vadd.f32 %v1073, %v1074
        %v1076 = vmul.f32 %v1075, %v539
        %v1077 = vadd.f32 %v1076, 1e-05
        %v1078 = vrsqrt.pop %v1077
        %v1079 = vmul.f32 %v1078, %v1077
        %v1080 = vmul.f32 %v1079, %v1078
        %v1081 = vmul.f32 0.5, %v1080
        %v1082 = vsub.f32 1.5, %v1081
        %v1083 = vmul.f32 %v1078, %v1082
        %vm1084 = vweird.f32 %v1077
        %vm1085 = vweird.f32 %v1078
        %vm1086 = vmor %vm1084, %vm1085
        %v1087 = vsel %vm1086, %v1078, %v1083
        %v1088 = vmul.f32 %v1068, %v1087
        %v1089 = vperm.slane %v1058, 1
        %v1090 = vmul.f32 %v1088, %v1089
        %v1091 = vperm.slane %v1058, 2
        %v1092 = vadd.f32 %v1090, %v1091
        %vm1093 = vcmp.ge.f32.partialorder %v1092, 0.0
        %v1094 = vmul.f32 %v1092, 0.2
        %v1095 = vsel %vm1093, %v1092, %v1094
        %v1096 = vld [vmem:[#allocation11 + $0x10] sm:$0xff]
        %v1097 = vld [vmem:[#allocation11 + $0x18] sm:$0xff]
        %v1098 = vld [vmem:[#allocation11 + $0x20] sm:$0xff]
        %v1099 = vld [vmem:[#allocation11 + $0x28] sm:$0xff]
        %v1100 = vld [vmem:[#allocation11 + $0x30] sm:$0xff]
        %v1101 = vld [vmem:[#allocation11 + $0x38] sm:$0xff]
        %v1102 = vld [vmem:[#allocation11 + $0x40] sm:$0xff]
        %v1103 = vld [vmem:[#allocation11 + $0x48] sm:$0xff]
        %v1104 = vld [vmem:[#allocation11 + $0x50] sm:$0xff]
        %v1105 = vld [vmem:[#allocation11 + $0x58] sm:$0xff]
        %v1106 = vld [vmem:[#allocation11 + $0x60] sm:$0xff]
        %v1107 = vld [vmem:[#allocation11 + $0x68] sm:$0xff]
        %v1108 = vld [vmem:[#allocation11 + $0x70] sm:$0xff]
        %v1109 = vld [vmem:[#allocation11 + $0x78] sm:$0xff]
        %v1110 = vld [vmem:[#allocation11 + $0x80] sm:$0xff]
        %v1111 = vld [vmem:[#allocation11 + $0x88] sm:$0xff]
        %v1112 = vld [vmem:[#allocation11 + $0x90] sm:$0x7]
        %v1113 = vperm.slane %v1112, 0
        %1114 = vmatpush.msra.mxu0 %v1111
        %1115 = vmatpush.msra.mxu0 %v1110
        %1116 = vmatpush.msra.mxu0 %v1109
        %1117 = vmatpush.msra.mxu0 %v1108
        %1118 = vmatpush.msra.mxu0 %v1107
        %1119 = vmatpush.msra.mxu0 %v1106
        %1120 = vmatpush.msra.mxu0 %v1105
        %1121 = vmatpush.msra.mxu0 %v1104
        %1122 = vmatpush.msra.mxu0 %v1103
        %1123 = vmatpush.msra.mxu0 %v1102
        %1124 = vmatpush.msra.mxu0 %v1101
        %1125 = vmatpush.msra.mxu0 %v1100
        %1126 = vmatpush.msra.mxu0 %v1099
        %1127 = vmatpush.msra.mxu0 %v1098
        %1128 = vmatpush.msra.mxu0 %v1097
        %1129 = vmatpush.msra.mxu0 %v1096
        %1130 = vmatmul.f32.gmra.mxu0 %v1095
        %v1131 = vpop.f32.mrf.mxu0
        %v1132 = vadd.f32 %v1113, %v1131
        %1133 = vdwg.mxu0
        %v1134 = vrot.slane %v1132, 4
        %v1135 = vadd.f32 %v1132, %v1134
        %v1136 = vrot.slane %v1135, 2
        %v1137 = vadd.f32 %v1135, %v1136
        %v1138 = vrot.slane %v1137, 1
        %v1139 = vadd.f32 %v1137, %v1138
        %v1140 = vmul.f32 %v1139, %v539
        %v1141 = vsub.f32 %v1132, %v1140
        %v1142 = vmul.f32 %v1141, %v1141
        %v1143 = vrot.slane %v1142, 4
        %v1144 = vadd.f32 %v1142, %v1143
        %v1145 = vrot.slane %v1144, 2
        %v1146 = vadd.f32 %v1144, %v1145
        %v1147 = vrot.slane %v1146, 1
        %v1148 = vadd.f32 %v1146, %v1147
        %v1149 = vmul.f32 %v1148, %v539
        %v1150 = vadd.f32 %v1149, 1e-05
        %v1151 = vrsqrt.pop %v1150
        %v1152 = vmul.f32 %v1151, %v1150
        %v1153 = vmul.f32 %v1152, %v1151
        %v1154 = vmul.f32 0.5, %v1153
        %v1155 = vsub.f32 1.5, %v1154
        %v1156 = vmul.f32 %v1151, %v1155
        %vm1157 = vweird.f32 %v1150
        %vm1158 = vweird.f32 %v1151
        %vm1159 = vmor %vm1157, %vm1158
        %v1160 = vsel %vm1159, %v1151, %v1156
        %v1161 = vmul.f32 %v1141, %v1160
        %v1162 = vperm.slane %v1112, 1
        %v1163 = vmul.f32 %v1161, %v1162
        %v1164 = vperm.slane %v1112, 2
        %v1165 = vadd.f32 %v1163, %v1164
        %vm1166 = vcmp.ge.f32.partialorder %v1165, 0.0
        %v1167 = vmul.f32 %v1165, 0.2
        %v1168 = vsel %vm1166, %v1165, %v1167
        %v1169 = vld [vmem:[#allocation11 + $0x98] sm:$0xff]
        %v1170 = vld [vmem:[#allocation11 + $0xa0] sm:$0xff]
        %v1171 = vld [vmem:[#allocation11 + $0xa8] sm:$0xff]
        %v1172 = vld [vmem:[#allocation11 + $0xb0] sm:$0xff]
        %v1173 = vld [vmem:[#allocation11 + $0xb8] sm:$0xff]
        %v1174 = vld [vmem:[#allocation11 + $0xc0] sm:$0xff]
        %v1175 = vld [vmem:[#allocation11 + $0xc8] sm:$0xff]
        %v1176 = vld [vmem:[#allocation11 + $0xd0] sm:$0xff]
        %v1177 = vld [vmem:[#allocation11 + $0xd8] sm:$0xff]
        %v1178 = vld [vmem:[#allocation11 + $0xe0] sm:$0xff]
        %v1179 = vld [vmem:[#allocation11 + $0xe8] sm:$0xff]
        %v1180 = vld [vmem:[#allocation11 + $0xf0] sm:$0xff]
        %v1181 = vld [vmem:[#allocation11 + $0xf8] sm:$0xff]
        %v1182 = vld [vmem:[#allocation11 + $0x100] sm:$0xff]
        %v1183 = vld [vmem:[#allocation11 + $0x108] sm:$0xff]
        %v1184 = vld [vmem:[#allocation11 + $0x110] sm:$0xff]
        %v1185 = vld [vmem:[#allocation11 + $0x118] sm:$0x7]
        %v1186 = vperm.slane %v1185, 0
        %1187 = vmatpush.msra.mxu0 %v1184
        %1188 = vmatpush.msra.mxu0 %v1183
        %1189 = vmatpush.msra.mxu0 %v1182
        %1190 = vmatpush.msra.mxu0 %v1181
        %1191 = vmatpush.msra.mxu0 %v1180
        %1192 = vmatpush.msra.mxu0 %v1179
        %1193 = vmatpush.msra.mxu0 %v1178
        %1194 = vmatpush.msra.mxu0 %v1177
        %1195 = vmatpush.msra.mxu0 %v1176
        %1196 = vmatpush.msra.mxu0 %v1175
        %1197 = vmatpush.msra.mxu0 %v1174
        %1198 = vmatpush.msra.mxu0 %v1173
        %1199 = vmatpush.msra.mxu0 %v1172
        %1200 = vmatpush.msra.mxu0 %v1171
        %1201 = vmatpush.msra.mxu0 %v1170
        %1202 = vmatpush.msra.mxu0 %v1169
        %1203 = vmatmul.f32.gmra.mxu0 %v1168
        %v1204 = vpop.f32.mrf.mxu0
        %v1205 = vadd.f32 %v1186, %v1204
        %1206 = vdwg.mxu0
        %v1207 = vrot.slane %v1205, 4
        %v1208 = vadd.f32 %v1205, %v1207
        %v1209 = vrot.slane %v1208, 2
        %v1210 = vadd.f32 %v1208, %v1209
        %v1211 = vrot.slane %v1210, 1
        %v1212 = vadd.f32 %v1210, %v1211
        %v1213 = vmul.f32 %v1212, %v539
        %v1214 = vsub.f32 %v1205, %v1213
        %v1215 = vmul.f32 %v1214, %v1214
        %v1216 = vrot.slane %v1215, 4
        %v1217 = vadd.f32 %v1215, %v1216
        %v1218 = vrot.slane %v1217, 2
        %v1219 = vadd.f32 %v1217, %v1218
        %v1220 = vrot.slane %v1219, 1
        %v1221 = vadd.f32 %v1219, %v1220
        %v1222 = vmul.f32 %v1221, %v539
        %v1223 = vadd.f32 %v1222, 1e-05
        %v1224 = vrsqrt.pop %v1223
        %v1225 = vmul.f32 %v1224, %v1223
        %v1226 = vmul.f32 %v1225, %v1224
        %v1227 = vmul.f32 0.5, %v1226
        %v1228 = vsub.f32 1.5, %v1227
        %v1229 = vmul.f32 %v1224, %v1228
        %vm1230 = vweird.f32 %v1223
        %vm1231 = vweird.f32 %v1224
        %vm1232 = vmor %vm1230, %vm1231
        %v1233 = vsel %vm1232, %v1224, %v1229
        %v1234 = vmul.f32 %v1214, %v1233
        %v1235 = vperm.slane %v1185, 1
        %v1236 = vmul.f32 %v1234, %v1235
        %v1237 = vperm.slane %v1185, 2
        %v1238 = vadd.f32 %v1236, %v1237
        %vm1239 = vcmp.ge.f32.partialorder %v1238, 0.0
        %v1240 = vmul.f32 %v1238, 0.2
        %v1241 = vsel %vm1239, %v1238, %v1240
        %v1242 = vld [vmem:[#allocation11 + $0x120] sm:$0xff]
        %v1243 = vld [vmem:[#allocation11 + $0x128] sm:$0xff]
        %v1244 = vld [vmem:[#allocation11 + $0x130] sm:$0xff]
        %v1245 = vld [vmem:[#allocation11 + $0x138] sm:$0xff]
        %v1246 = vld [vmem:[#allocation11 + $0x140] sm:$0xff]
        %v1247 = vld [vmem:[#allocation11 + $0x148] sm:$0xff]
        %v1248 = vld [vmem:[#allocation11 + $0x150] sm:$0xff]
        %v1249 = vld [vmem:[#allocation11 + $0x158] sm:$0xff]
        %v1250 = vld [vmem:[#allocation11 + $0x160] sm:$0xff]
        %v1251 = vld [vmem:[#allocation11 + $0x168] sm:$0xff]
        %v1252 = vld [vmem:[#allocation11 + $0x170] sm:$0xff]
        %v1253 = vld [vmem:[#allocation11 + $0x178] sm:$0xff]
        %v1254 = vld [vmem:[#allocation11 + $0x180] sm:$0xff]
        %v1255 = vld [vmem:[#allocation11 + $0x188] sm:$0xff]
        %v1256 = vld [vmem:[#allocation11 + $0x190] sm:$0xff]
        %v1257 = vld [vmem:[#allocation11 + $0x198] sm:$0xff]
        %v1258 = vld [vmem:[#allocation11 + $0x1a0] sm:$0x1]
        %v1259 = vperm.slane %v1258, 0
        %1260 = vmatpush.msra.mxu0 %v1257
        %1261 = vmatpush.msra.mxu0 %v1256
        %1262 = vmatpush.msra.mxu0 %v1255
        %1263 = vmatpush.msra.mxu0 %v1254
        %1264 = vmatpush.msra.mxu0 %v1253
        %1265 = vmatpush.msra.mxu0 %v1252
        %1266 = vmatpush.msra.mxu0 %v1251
        %1267 = vmatpush.msra.mxu0 %v1250
        %1268 = vmatpush.msra.mxu0 %v1249
        %1269 = vmatpush.msra.mxu0 %v1248
        %1270 = vmatpush.msra.mxu0 %v1247
        %1271 = vmatpush.msra.mxu0 %v1246
        %1272 = vmatpush.msra.mxu0 %v1245
        %1273 = vmatpush.msra.mxu0 %v1244
        %1274 = vmatpush.msra.mxu0 %v1243
        %1275 = vmatpush.msra.mxu0 %v1242
        %1276 = vmatmul.f32.gmra.mxu0 %v1241
        %v1277 = vpop.f32.mrf.mxu0
        %v1278 = vadd.f32 %v1259, %v1277
        %1279 = vdwg.mxu0
        %1280 = vst [vmem:[%s472] sm:$0xff] %v1278
        %v1281 = vld [vmem:[#allocation13] sm:$0x3]
        %v1282 = vperm.slane %v1281, 0
        %v1283 = vmul.f32 %v1047, %v1282
        %v1284 = vperm.slane %v1281, 1
        %v1285 = vmul.f32 %v1053, %v1284
        %v1286 = vadd.f32 %v1283, %v1285
        %v1287 = vld [vmem:[#allocation13 + $0x8] sm:$0x7]
        %v1288 = vperm.slane %v1287, 0
        %v1289 = vadd.f32 %v1286, %v1288
        %v1290 = vrot.slane %v1289, 4
        %v1291 = vadd.f32 %v1289, %v1290
        %v1292 = vrot.slane %v1291, 2
        %v1293 = vadd.f32 %v1291, %v1292
        %v1294 = vrot.slane %v1293, 1
        %v1295 = vadd.f32 %v1293, %v1294
        %v1296 = vmul.f32 %v1295, %v539
        %v1297 = vsub.f32 %v1289, %v1296
        %v1298 = vmul.f32 %v1297, %v1297
        %v1299 = vrot.slane %v1298, 4
        %v1300 = vadd.f32 %v1298, %v1299
        %v1301 = vrot.slane %v1300, 2
        %v1302 = vadd.f32 %v1300, %v1301
        %v1303 = vrot.slane %v1302, 1
        %v1304 = vadd.f32 %v1302, %v1303
        %v1305 = vmul.f32 %v1304, %v539
        %v1306 = vadd.f32 %v1305, 1e-05
        %v1307 = vrsqrt.pop %v1306
        %v1308 = vmul.f32 %v1307, %v1306
        %v1309 = vmul.f32 %v1308, %v1307
        %v1310 = vmul.f32 0.5, %v1309
        %v1311 = vsub.f32 1.5, %v1310
        %v1312 = vmul.f32 %v1307, %v1311
        %vm1313 = vweird.f32 %v1306
        %vm1314 = vweird.f32 %v1307
        %vm1315 = vmor %vm1313, %vm1314
        %v1316 = vsel %vm1315, %v1307, %v1312
        %v1317 = vmul.f32 %v1297, %v1316
        %v1318 = vperm.slane %v1287, 1
        %v1319 = vmul.f32 %v1317, %v1318
        %v1320 = vperm.slane %v1287, 2
        %v1321 = vadd.f32 %v1319, %v1320
        %vm1322 = vcmp.ge.f32.partialorder %v1321, 0.0
        %v1323 = vmul.f32 %v1321, 0.2
        %v1324 = vsel %vm1322, %v1321, %v1323
        %v1325 = vld [vmem:[#allocation13 + $0x10] sm:$0xff]
        %v1326 = vld [vmem:[#allocation13 + $0x18] sm:$0xff]
        %v1327 = vld [vmem:[#allocation13 + $0x20] sm:$0xff]
        %v1328 = vld [vmem:[#allocation13 + $0x28] sm:$0xff]
        %v1329 = vld [vmem:[#allocation13 + $0x30] sm:$0xff]
        %v1330 = vld [vmem:[#allocation13 + $0x38] sm:$0xff]
        %v1331 = vld [vmem:[#allocation13 + $0x40] sm:$0xff]
        %v1332 = vld [vmem:[#allocation13 + $0x48] sm:$0xff]
        %v1333 = vld [vmem:[#allocation13 + $0x50] sm:$0xff]
        %v1334 = vld [vmem:[#allocation13 + $0x58] sm:$0xff]
        %v1335 = vld [vmem:[#allocation13 + $0x60] sm:$0xff]
        %v1336 = vld [vmem:[#allocation13 + $0x68] sm:$0xff]
        %v1337 = vld [vmem:[#allocation13 + $0x70] sm:$0xff]
        %v1338 = vld [vmem:[#allocation13 + $0x78] sm:$0xff]
        %v1339 = vld [vmem:[#allocation13 + $0x80] sm:$0xff]
        %v1340 = vld [vmem:[#allocation13 + $0x88] sm:$0xff]
        %v1341 = vld [vmem:[#allocation13 + $0x90] sm:$0x7]
        %v1342 = vperm.slane %v1341, 0
        %1343 = vmatpush.msra.mxu0 %v1340
        %1344 = vmatpush.msra.mxu0 %v1339
        %1345 = vmatpush.msra.mxu0 %v1338
        %1346 = vmatpush.msra.mxu0 %v1337
        %1347 = vmatpush.msra.mxu0 %v1336
        %1348 = vmatpush.msra.mxu0 %v1335
        %1349 = vmatpush.msra.mxu0 %v1334
        %1350 = vmatpush.msra.mxu0 %v1333
        %1351 = vmatpush.msra.mxu0 %v1332
        %1352 = vmatpush.msra.mxu0 %v1331
        %1353 = vmatpush.msra.mxu0 %v1330
        %1354 = vmatpush.msra.mxu0 %v1329
        %1355 = vmatpush.msra.mxu0 %v1328
        %1356 = vmatpush.msra.mxu0 %v1327
        %1357 = vmatpush.msra.mxu0 %v1326
        %1358 = vmatpush.msra.mxu0 %v1325
        %1359 = vmatmul.f32.gmra.mxu0 %v1324
        %v1360 = vpop.f32.mrf.mxu0
        %v1361 = vadd.f32 %v1342, %v1360
        %1362 = vdwg.mxu0
        %v1363 = vrot.slane %v1361, 4
        %v1364 = vadd.f32 %v1361, %v1363
        %v1365 = vrot.slane %v1364, 2
        %v1366 = vadd.f32 %v1364, %v1365
        %v1367 = vrot.slane %v1366, 1
        %v1368 = vadd.f32 %v1366, %v1367
        %v1369 = vmul.f32 %v1368, %v539
        %v1370 = vsub.f32 %v1361, %v1369
        %v1371 = vmul.f32 %v1370, %v1370
        %v1372 = vrot.slane %v1371, 4
        %v1373 = vadd.f32 %v1371, %v1372
        %v1374 = vrot.slane %v1373, 2
        %v1375 = vadd.f32 %v1373, %v1374
        %v1376 = vrot.slane %v1375, 1
        %v1377 = vadd.f32 %v1375, %v1376
        %v1378 = vmul.f32 %v1377, %v539
        %v1379 = vadd.f32 %v1378, 1e-05
        %v1380 = vrsqrt.pop %v1379
        %v1381 = vmul.f32 %v1380, %v1379
        %v1382 = vmul.f32 %v1381, %v1380
        %v1383 = vmul.f32 0.5, %v1382
        %v1384 = vsub.f32 1.5, %v1383
        %v1385 = vmul.f32 %v1380, %v1384
        %vm1386 = vweird.f32 %v1379
        %vm1387 = vweird.f32 %v1380
        %vm1388 = vmor %vm1386, %vm1387
        %v1389 = vsel %vm1388, %v1380, %v1385
        %v1390 = vmul.f32 %v1370, %v1389
        %v1391 = vperm.slane %v1341, 1
        %v1392 = vmul.f32 %v1390, %v1391
        %v1393 = vperm.slane %v1341, 2
        %v1394 = vadd.f32 %v1392, %v1393
        %vm1395 = vcmp.ge.f32.partialorder %v1394, 0.0
        %v1396 = vmul.f32 %v1394, 0.2
        %v1397 = vsel %vm1395, %v1394, %v1396
        %v1398 = vld [vmem:[#allocation13 + $0x98] sm:$0xff]
        %v1399 = vld [vmem:[#allocation13 + $0xa0] sm:$0xff]
        %v1400 = vld [vmem:[#allocation13 + $0xa8] sm:$0xff]
        %v1401 = vld [vmem:[#allocation13 + $0xb0] sm:$0xff]
        %v1402 = vld [vmem:[#allocation13 + $0xb8] sm:$0xff]
        %v1403 = vld [vmem:[#allocation13 + $0xc0] sm:$0xff]
        %v1404 = vld [vmem:[#allocation13 + $0xc8] sm:$0xff]
        %v1405 = vld [vmem:[#allocation13 + $0xd0] sm:$0xff]
        %v1406 = vld [vmem:[#allocation13 + $0xd8] sm:$0xff]
        %v1407 = vld [vmem:[#allocation13 + $0xe0] sm:$0xff]
        %v1408 = vld [vmem:[#allocation13 + $0xe8] sm:$0xff]
        %v1409 = vld [vmem:[#allocation13 + $0xf0] sm:$0xff]
        %v1410 = vld [vmem:[#allocation13 + $0xf8] sm:$0xff]
        %v1411 = vld [vmem:[#allocation13 + $0x100] sm:$0xff]
        %v1412 = vld [vmem:[#allocation13 + $0x108] sm:$0xff]
        %v1413 = vld [vmem:[#allocation13 + $0x110] sm:$0xff]
        %v1414 = vld [vmem:[#allocation13 + $0x118] sm:$0x7]
        %v1415 = vperm.slane %v1414, 0
        %1416 = vmatpush.msra.mxu0 %v1413
        %1417 = vmatpush.msra.mxu0 %v1412
        %1418 = vmatpush.msra.mxu0 %v1411
        %1419 = vmatpush.msra.mxu0 %v1410
        %1420 = vmatpush.msra.mxu0 %v1409
        %1421 = vmatpush.msra.mxu0 %v1408
        %1422 = vmatpush.msra.mxu0 %v1407
        %1423 = vmatpush.msra.mxu0 %v1406
        %1424 = vmatpush.msra.mxu0 %v1405
        %1425 = vmatpush.msra.mxu0 %v1404
        %1426 = vmatpush.msra.mxu0 %v1403
        %1427 = vmatpush.msra.mxu0 %v1402
        %1428 = vmatpush.msra.mxu0 %v1401
        %1429 = vmatpush.msra.mxu0 %v1400
        %1430 = vmatpush.msra.mxu0 %v1399
        %1431 = vmatpush.msra.mxu0 %v1398
        %1432 = vmatmul.f32.gmra.mxu0 %v1397
        %v1433 = vpop.f32.mrf.mxu0
        %v1434 = vadd.f32 %v1415, %v1433
        %1435 = vdwg.mxu0
        %v1436 = vrot.slane %v1434, 4
        %v1437 = vadd.f32 %v1434, %v1436
        %v1438 = vrot.slane %v1437, 2
        %v1439 = vadd.f32 %v1437, %v1438
        %v1440 = vrot.slane %v1439, 1
        %v1441 = vadd.f32 %v1439, %v1440
        %v1442 = vmul.f32 %v1441, %v539
        %v1443 = vsub.f32 %v1434, %v1442
        %v1444 = vmul.f32 %v1443, %v1443
        %v1445 = vrot.slane %v1444, 4
        %v1446 = vadd.f32 %v1444, %v1445
        %v1447 = vrot.slane %v1446, 2
        %v1448 = vadd.f32 %v1446, %v1447
        %v1449 = vrot.slane %v1448, 1
        %v1450 = vadd.f32 %v1448, %v1449
        %v1451 = vmul.f32 %v1450, %v539
        %v1452 = vadd.f32 %v1451, 1e-05
        %v1453 = vrsqrt.pop %v1452
        %v1454 = vmul.f32 %v1453, %v1452
        %v1455 = vmul.f32 %v1454, %v1453
        %v1456 = vmul.f32 0.5, %v1455
        %v1457 = vsub.f32 1.5, %v1456
        %v1458 = vmul.f32 %v1453, %v1457
        %vm1459 = vweird.f32 %v1452
        %vm1460 = vweird.f32 %v1453
        %vm1461 = vmor %vm1459, %vm1460
        %v1462 = vsel %vm1461, %v1453, %v1458
        %v1463 = vmul.f32 %v1443, %v1462
        %v1464 = vperm.slane %v1414, 1
        %v1465 = vmul.f32 %v1463, %v1464
        %v1466 = vperm.slane %v1414, 2
        %v1467 = vadd.f32 %v1465, %v1466
        %vm1468 = vcmp.ge.f32.partialorder %v1467, 0.0
        %v1469 = vmul.f32 %v1467, 0.2
        %v1470 = vsel %vm1468, %v1467, %v1469
        %v1471 = vld [vmem:[#allocation13 + $0x120] sm:$0xff]
        %v1472 = vld [vmem:[#allocation13 + $0x128] sm:$0xff]
        %v1473 = vld [vmem:[#allocation13 + $0x130] sm:$0xff]
        %v1474 = vld [vmem:[#allocation13 + $0x138] sm:$0xff]
        %v1475 = vld [vmem:[#allocation13 + $0x140] sm:$0xff]
        %v1476 = vld [vmem:[#allocation13 + $0x148] sm:$0xff]
        %v1477 = vld [vmem:[#allocation13 + $0x150] sm:$0xff]
        %v1478 = vld [vmem:[#allocation13 + $0x158] sm:$0xff]
        %v1479 = vld [vmem:[#allocation13 + $0x160] sm:$0xff]
        %v1480 = vld [vmem:[#allocation13 + $0x168] sm:$0xff]
        %v1481 = vld [vmem:[#allocation13 + $0x170] sm:$0xff]
        %v1482 = vld [vmem:[#allocation13 + $0x178] sm:$0xff]
        %v1483 = vld [vmem:[#allocation13 + $0x180] sm:$0xff]
        %v1484 = vld [vmem:[#allocation13 + $0x188] sm:$0xff]
        %v1485 = vld [vmem:[#allocation13 + $0x190] sm:$0xff]
        %v1486 = vld [vmem:[#allocation13 + $0x198] sm:$0xff]
        %v1487 = vld [vmem:[#allocation13 + $0x1a0] sm:$0x1]
        %v1488 = vperm.slane %v1487, 0
        %1489 = vmatpush.msra.mxu0 %v1486
        %1490 = vmatpush.msra.mxu0 %v1485
        %1491 = vmatpush.msra.mxu0 %v1484
        %1492 = vmatpush.msra.mxu0 %v1483
        %1493 = vmatpush.msra.mxu0 %v1482
        %1494 = vmatpush.msra.mxu0 %v1481
        %1495 = vmatpush.msra.mxu0 %v1480
        %1496 = vmatpush.msra.mxu0 %v1479
        %1497 = vmatpush.msra.mxu0 %v1478
        %1498 = vmatpush.msra.mxu0 %v1477
        %1499 = vmatpush.msra.mxu0 %v1476
        %1500 = vmatpush.msra.mxu0 %v1475
        %1501 = vmatpush.msra.mxu0 %v1474
        %1502 = vmatpush.msra.mxu0 %v1473
        %1503 = vmatpush.msra.mxu0 %v1472
        %1504 = vmatpush.msra.mxu0 %v1471
        %1505 = vmatmul.f32.gmra.mxu0 %v1470
        %v1506 = vpop.f32.mrf.mxu0
        %v1507 = vadd.f32 %v1488, %v1506
        %1508 = vdwg.mxu0
        %1509 = vst [vmem:[%s479] sm:$0xff] %v1507
        %s1510 = sand.u32 %s200, 1
        %s1511 = scalar_lea.sflag [#allocation4], %s1510
        %s1512 = sand.u32 %s200, 1
        %s1513 = smul.addr %s1512, 8
        %s1514 = scalar_lea.vmem [#allocation14], %s1513
        %s1515 = sand.u32 %s35, 1
        %s1516 = scalar_lea.sflag [#allocation16], %s1515
        %s1517 = sand.u32 %s226, 1
        %s1518 = smul.addr %s1517, 8
        %s1519 = scalar_lea.vmem [#allocation15], %s1518
        %s1520 = sand.u32 %s35, 1
        %s1521 = scalar_lea.sflag [#allocation16], %s1520
        %s1522 = sand.u32 %s252, 1
        %s1523 = smul.addr %s1522, 8
        %s1524 = scalar_lea.vmem [#allocation17], %s1523
        // Predicated region
        $region77: #{tpu_custom_call.1} parent=47 // pred_check
          %p1525 = pneg %p210
        $region78: #{tpu_custom_call.1} parent=47 // pred_check_branch
          %1527 = sbr.rel (%p1525) target = $region80
        $region79: #{tpu_custom_call.1} parent=47 // pred_region
          %1529 = vsyncadd %s1511, 0
          %s1530 = smul.addr %s35, 8
          %s1531 = scalar_lea.hbm %s7, %s1530
          %s1533 = sshll.u32 %s1514, 4
          %s1534 = int_to_ptr.vmem [resolvable:$true] %s1533
          %s1535 = sshll.u32 %s1531, 4
          %s1536 = int_to_ptr.hbm [resolvable:$true] %s1535
          %1538 = dma.vmem_to_hbm [thread:$0]  %s1534, 128, %s1536, %s1511
        $region80: #{tpu_custom_call.1} parent=47 // pred_fallthru
          _
        // Predicated region
        $region81: #{tpu_custom_call.1} parent=47 // pred_check
          %p1539 = pneg %p236
        $region82: #{tpu_custom_call.1} parent=47 // pred_check_branch
          %1541 = sbr.rel (%p1539) target = $region84
        $region83: #{tpu_custom_call.1} parent=47 // pred_region
          %1543 = vsyncadd %s1516, 0
          %s1544 = smul.addr %s35, 8
          %s1545 = scalar_lea.hbm %s8, %s1544
          %s1547 = sshll.u32 %s1519, 4
          %s1548 = int_to_ptr.vmem [resolvable:$true] %s1547
          %s1549 = sshll.u32 %s1545, 4
          %s1550 = int_to_ptr.hbm [resolvable:$true] %s1549
          %1552 = dma.vmem_to_hbm [thread:$0]  %s1548, 128, %s1550, %s1516
        $region84: #{tpu_custom_call.1} parent=47 // pred_fallthru
          _
        // Predicated region
        $region85: #{tpu_custom_call.1} parent=47 // pred_check
          %p1553 = pneg %p262
        $region86: #{tpu_custom_call.1} parent=47 // pred_check_branch
          %1555 = sbr.rel (%p1553) target = $region88
        $region87: #{tpu_custom_call.1} parent=47 // pred_region
          %1557 = vsyncadd %s1521, 0
          %s1558 = smul.addr %s35, 8
          %s1559 = scalar_lea.hbm %s9, %s1558
          %s1561 = sshll.u32 %s1524, 4
          %s1562 = int_to_ptr.vmem [resolvable:$true] %s1561
          %s1563 = sshll.u32 %s1559, 4
          %s1564 = int_to_ptr.hbm [resolvable:$true] %s1563
          %1566 = dma.vmem_to_hbm [thread:$0]  %s1562, 128, %s1564, %s1521
        $region88: #{tpu_custom_call.1} parent=47 // pred_fallthru
          _
      $region48: #{tpu_custom_call.1} parent=5 // pred_fallthru
        _
      %p1567 = scmp.le.s32.totalorder 2, %s30
      // Predicated region
      $region89: #{tpu_custom_call.1} parent=5 // pred_check
        %p1568 = pneg %p1567
      $region90: #{tpu_custom_call.1} parent=5 // pred_check_branch
        %1570 = sbr.rel (%p1568) target = $region92
      $region91: #{tpu_custom_call.1} parent=5 // pred_region
        %s1571 = ssub.s32 %s30, 2
        // Predicated region
        $region93: #{tpu_custom_call.1} parent=91 // pred_check
          %p1572 = pneg %p216
        $region94: #{tpu_custom_call.1} parent=91 // pred_check_branch
          %1574 = sbr.rel (%p1572) target = $region96
        $region95: #{tpu_custom_call.1} parent=91 // pred_region
          %s1575 = sand.u32 %s201, 1
          %s1576 = scalar_lea.sflag [#allocation4], %s1575
          %s1577 = sand.u32 %s201, 1
          %s1578 = smul.addr %s1577, 8
          %s1579 = scalar_lea.vmem [#allocation14], %s1578
          %1581 = dma.done %s1576, 128
        $region96: #{tpu_custom_call.1} parent=91 // pred_fallthru
          _
        // Predicated region
        $region97: #{tpu_custom_call.1} parent=91 // pred_check
          %p1582 = pneg %p242
        $region98: #{tpu_custom_call.1} parent=91 // pred_check_branch
          %1584 = sbr.rel (%p1582) target = $region100
        $region99: #{tpu_custom_call.1} parent=91 // pred_region
          %s1585 = sand.u32 %s36, 1
          %s1586 = scalar_lea.sflag [#allocation16], %s1585
          %s1587 = sand.u32 %s227, 1
          %s1588 = smul.addr %s1587, 8
          %s1589 = scalar_lea.vmem [#allocation15], %s1588
          %1591 = dma.done %s1586, 128
        $region100: #{tpu_custom_call.1} parent=91 // pred_fallthru
          _
        // Predicated region
        $region101: #{tpu_custom_call.1} parent=91 // pred_check
          %p1592 = pneg %p268
        $region102: #{tpu_custom_call.1} parent=91 // pred_check_branch
          %1594 = sbr.rel (%p1592) target = $region104
        $region103: #{tpu_custom_call.1} parent=91 // pred_region
          %s1595 = sand.u32 %s36, 1
          %s1596 = scalar_lea.sflag [#allocation16], %s1595
          %s1597 = sand.u32 %s253, 1
          %s1598 = smul.addr %s1597, 8
          %s1599 = scalar_lea.vmem [#allocation17], %s1598
          %1601 = dma.done %s1596, 128
        $region104: #{tpu_custom_call.1} parent=91 // pred_fallthru
          _
      $region92: #{tpu_custom_call.1} parent=5 // pred_fallthru
        _
    $region6: #{tpu_custom_call.1} parent=1 // loop_footer
      %s34 = sadd.s32 1, %s30
    $region7: #{tpu_custom_call.1} parent=1 // loop_footer_branch
      %29 = sbr.rel target = $region3
    $region8: #{tpu_custom_call.1} parent=1 // loop_exit
      _
    %1602 = vsyncpa [#allocation3], 1
    %s1603 = scalar_lea.sflag [#allocation3], 1
    %1604 = vsyncpa %s1603, 1
    %1605 = vsyncpa [#allocation6], 1
    %s1606 = scalar_lea.sflag [#allocation6], 1
    %1607 = vsyncpa %s1606, 1
    %1608 = vsyncpa [#allocation9], 1
    %1609 = vsyncpa [#allocation12], 1
    %1610 = vsyncpa [#allocation4], 1
    %s1611 = scalar_lea.sflag [#allocation4], 1
    %1612 = vsyncpa %s1611, 1
    %1613 = vsyncpa [#allocation16], 1
    %s1614 = scalar_lea.sflag [#allocation16], 1
    %1615 = vsyncpa %s1614, 1

</llo_original>
